<compile_context>
chip_gen: v7x
topology: tpu7x:2x2x1
jax: 0.10.0
libtpu: 0.0.40
codegen_flags: <defaults>
</compile_context>

<pallas_src>
import functools

import jax
import jax.numpy as jnp
from jax.experimental import pallas as pl
from jax.experimental.pallas import tpu as pltpu


def _round_up(x, m):
    return ((x + m - 1) // m) * m


def _vmem_limit_bytes(nbytes):
    """Explicit scoped-VMEM request: 2x headroom + 4 MiB, clamped to [16, 64] MiB."""
    return int(min(max(2 * nbytes + (4 << 20), 16 << 20), 64 << 20))


# ----------------------------------------------------------------------------
# Kernel 1: Attention_Block MLP + softmax + per-batch kernel/bias aggregation.
# Runs once (no grid).  All operands are small; doing the aggregation here (one
# MXU dot) hoists it out of the per-spatial-tile conv loop in kernel 2.
# ----------------------------------------------------------------------------
def _attention_agg_kernel(pooled_ref, w1_ref, b1_ref, w2_ref, b2_ref,
                          pk_ref, pb_ref, attn_ref, aggw_ref, aggb_ref):
    # pooled_ref : (B, C)            global-average-pooled input
    # w1_ref     : (C, BN)     b1_ref : (1, BN)
    # w2_ref     : (BN, NK)    b2_ref : (1, NK)   (already scaled by 1/temperature)
    # pk_ref     : (NK, KK*OC*C) bf16 tap-major flattened parallel kernel bank
    # pb_ref     : (NK, OC)          parallel biases
    # attn_ref   : (B, NK)           softmax attention scores           (out, f32)
    # aggw_ref   : (B, KK*OC*C)      per-batch aggregated conv weights  (out, bf16)
    # aggb_ref   : (B, OC)           per-batch aggregated biases        (out, f32)
    hi = jax.lax.Precision.HIGHEST  # MLP is tiny; keep exact numerics there
    h = jnp.dot(pooled_ref[...], w1_ref[...],
                preferred_element_type=jnp.float32, precision=hi) + b1_ref[...]
    h = jnp.maximum(h, 0.0)
    logits = jnp.dot(h, w2_ref[...],
                     preferred_element_type=jnp.float32, precision=hi) + b2_ref[...]
    m = jnp.max(logits, axis=-1, keepdims=True)
    e = jnp.exp(logits - m)
    attn = e / jnp.sum(e, axis=-1, keepdims=True)                    # (B, NK)
    attn_ref[...] = attn
    # Aggregation dots at DEFAULT precision (K = NK is tiny; result is consumed
    # in bf16 anyway) — no HIGHEST multi-pass MXU decomposition.
    aggw_ref[...] = jnp.dot(attn, pk_ref[...],
                            preferred_element_type=jnp.float32).astype(aggw_ref.dtype)
    aggb_ref[...] = jnp.dot(attn, pb_ref[...], preferred_element_type=jnp.float32)


# ----------------------------------------------------------------------------
# Kernel 2: dynamic conv (stride=1) as ks*ks shifted matmuls on the MXU.
# grid = (batch, spatial_tile).  The flat padded input (C, L_in) is resident
# across the spatial axis; each tap is a lane-shifted (C, TP) view of it.
# Output tile (1, OC, TP) is lane-dense (TP multiple of 128) -> unmasked stores.
# ----------------------------------------------------------------------------
def _dynconv_kernel(aggw_ref, aggb_ref, xflat_ref, out_ref, *,
                    tap_offsets, tp, tiled):
    # aggw_ref  : (1, KK, OC, C) bf16  aggregated weights, tap-major
    # aggb_ref  : (1, OC, 1)     f32   aggregated bias
    # xflat_ref : (1, C, L_in)   bf16  flat padded image (+ halo / alignment pad)
    # out_ref   : (1, OC, TP)          flat output tile (pseudo-width Wp)
    oc = out_ref.shape[1]
    if tiled:
        base = pl.multiple_of(pl.program_id(1) * tp, 128)
    else:
        base = 0  # spatial grid collapsed: all slice starts are static
    acc = jnp.zeros((oc, tp), jnp.float32)
    for i, off in enumerate(tap_offsets):
        view = xflat_ref[0, :, pl.ds(base + off, tp)]                # (C, TP)
        acc = acc + jnp.dot(aggw_ref[0, i], view,
                            preferred_element_type=jnp.float32)     # MXU, f32 acc
    out_ref[0] = (acc + aggb_ref[0]).astype(out_ref.dtype)


# ----------------------------------------------------------------------------
# Forward pass of DynamicConv2d
# ----------------------------------------------------------------------------
def dynamic_conv2d_forward(x, temperature, params, *, stride=1, padding=0,
                           dilation=1, groups=1, out_dtype=jnp.float32,
                           spatial_tile_cap=4096):
    # TODO(synk): groups > 1 and stride > 1 not implemented in the Pallas path.
    assert groups == 1, "grouped dynamic conv not implemented"
    assert stride == 1, "stride > 1 not implemented in the Pallas fast path"
    B, C, H, W = x.shape
    pk = params["parallel_kernels"]       # (NK, OC, C, ks, ks)
    pb = params["parallel_biases"]        # (NK, OC)
    w1 = params["dense1_w"]               # (C, BN)
    b1 = params["dense1_b"]               # (1, BN)
    w2 = params["dense2_w"]               # (BN, NK)
    b2 = params["dense2_b"]               # (1, NK)
    NK, OC, _, ks, _ = pk.shape
    KK = ks * ks

    # ---- glue: global average pool + fold 1/temperature into the 2nd dense ----
    pooled = jnp.mean(x, axis=(2, 3)).astype(jnp.float32)            # (B, C)
    inv_t = 1.0 / float(temperature)
    w2s = (w2 * inv_t).astype(jnp.float32)
    b2s = (b2 * inv_t).astype(jnp.float32)
    # Tap-major flattened kernel bank in bf16 (aggregated weights are consumed
    # in bf16 by the conv kernel anyway; halves kernel-1's largest operand).
    pk_perm = jnp.transpose(pk, (0, 3, 4, 1, 2)).reshape(NK, KK * OC * C)
    pk_perm = pk_perm.astype(jnp.bfloat16)
    pb_f32 = pb.astype(jnp.float32)

    # ---- Pallas kernel 1: attention + per-batch weight/bias aggregation ----
    k1_bytes = (pooled.size * 4 + w1.size * 4 + b1.size * 4 + w2s.size * 4
                + b2s.size * 4 + pk_perm.size * 2 + pb_f32.size * 4
                + B * NK * 4 + B * KK * OC * C * 2 + B * OC * 4)
    attn, aggw_flat, aggb = pl.pallas_call(
        _attention_agg_kernel,
        out_shape=(
            jax.ShapeDtypeStruct((B, NK), jnp.float32),
            jax.ShapeDtypeStruct((B, KK * OC * C), jnp.bfloat16),
            jax.ShapeDtypeStruct((B, OC), jnp.float32),
        ),
        in_specs=[pl.BlockSpec(memory_space=pltpu.MemorySpace.VMEM)] * 7,
        out_specs=tuple(pl.BlockSpec(memory_space=pltpu.MemorySpace.VMEM)
                        for _ in range(3)),
        compiler_params=pltpu.CompilerParams(
            vmem_limit_bytes=_vmem_limit_bytes(k1_bytes)),
    )(pooled, w1.astype(jnp.float32), b1.astype(jnp.float32), w2s, b2s,
      pk_perm, pb_f32)

    agg_w = aggw_flat.reshape(B, KK, OC, C)                          # bf16, tap-major
    agg_b = aggb.reshape(B, OC, 1)                                   # f32

    # ---- conv geometry (stride == 1): shifted-flat-image formulation --------
    Hp, Wp = H + 2 * padding, W + 2 * padding
    Hout = Hp - dilation * (ks - 1)
    Wout = Wp - dilation * (ks - 1)
    assert Hout > 0 and Wout > 0
    Pfl = Hout * Wp                       # flat output incl. (Wp - Wout) garbage cols
    tap_offsets = tuple((ki * Wp + kj) * dilation
                        for ki in range(ks) for kj in range(ks))
    max_off = tap_offsets[-1]

    # Spatial tile: always a multiple of 128 lanes; collapse the spatial grid
    # (one tile per batch element) whenever the whole flat image fits the cap.
    tp_full = _round_up(Pfl, 128)
    if tp_full <= spatial_tile_cap:
        TP, nT = tp_full, 1
    else:
        TP = spatial_tile_cap - (spatial_tile_cap % 128)
        nT = -(-Pfl // TP)

    # ---- glue: pad + flatten the input ONCE (no ks*ks im2col duplication) ----
    xp = jnp.pad(x, ((0, 0), (0, 0), (padding, padding), (padding, padding)))
    L = Hp * Wp
    L_in = nT * TP + max_off              # covers every shifted view of every tile
    xflat = xp.reshape(B, C, L).astype(jnp.bfloat16)
    xflat = jnp.pad(xflat, ((0, 0), (0, 0), (0, L_in - L)))

    # ---- Pallas kernel 2: dynamic conv, grid over (batch, spatial tile) ----
    out_bytes = jnp.dtype(out_dtype).itemsize
    k2_bytes = (C * L_in * 2 + KK * OC * C * 2 + OC * 4 + OC * TP * out_bytes)
    # TODO(synk): for images whose (C, Hp*Wp) slab does not fit VMEM, switch the
    # input to memory_space=pl.ANY + halo-ed manual make_async_copy.
    kernel = functools.partial(_dynconv_kernel, tap_offsets=tap_offsets,
                               tp=TP, tiled=(nT > 1))
    out_flat = pl.pallas_call(
        kernel,
        out_shape=jax.ShapeDtypeStruct((B, OC, nT * TP), out_dtype),
        grid=(B, nT),
        in_specs=[
            pl.BlockSpec((1, KK, OC, C), lambda b, t: (b, 0, 0, 0)),  # agg weights
            pl.BlockSpec((1, OC, 1), lambda b, t: (b, 0, 0)),         # agg bias
            pl.BlockSpec((1, C, L_in), lambda b, t: (b, 0, 0)),       # resident across t
        ],
        out_specs=pl.BlockSpec((1, OC, TP), lambda b, t: (b, 0, t)),
        compiler_params=pltpu.CompilerParams(
            dimension_semantics=("parallel", "parallel"),
            vmem_limit_bytes=_vmem_limit_bytes(k2_bytes)),
    )(agg_w, agg_b, xflat)

    # ---- glue: drop garbage columns (w >= Wout) and trailing alignment pad ----
    out = out_flat[:, :, :Pfl].reshape(B, OC, Hout, Wp)[:, :, :, :Wout]
    return out, attn


# ----------------------------------------------------------------------------
# Pure-JAX reference (mirrors the PyTorch forward exactly, full f32 precision)
# ----------------------------------------------------------------------------
def _reference(x, temperature, params, *, stride, padding, dilation):
    B, C, H, W = x.shape
    pk = params["parallel_kernels"]
    pb = params["parallel_biases"]
    NK, OC, _, ks, _ = pk.shape
    pooled = x.mean(axis=(2, 3))                                     # (B, C)
    h = jnp.maximum(
        jnp.dot(pooled, params["dense1_w"], precision=jax.lax.Precision.HIGHEST)
        + params["dense1_b"][0], 0.0)
    logits = jnp.dot(h, params["dense2_w"], precision=jax.lax.Precision.HIGHEST) \
        + params["dense2_b"][0]
    attn = jax.nn.softmax(logits / temperature, axis=-1)             # (B, NK)
    agg_w = jnp.dot(attn, pk.reshape(NK, -1),
                    precision=jax.lax.Precision.HIGHEST).reshape(B * OC, C, ks, ks)
    agg_b = jnp.dot(attn, pb, precision=jax.lax.Precision.HIGHEST).reshape(B * OC)
    xg = x.reshape(1, B * C, H, W)
    out = jax.lax.conv_general_dilated(
        xg, agg_w, window_strides=(stride, stride),
        padding=[(padding, padding), (padding, padding)],
        rhs_dilation=(dilation, dilation), feature_group_count=B,
        dimension_numbers=("NCHW", "OIHW", "NCHW"),
        precision=jax.lax.Precision.HIGHEST)
    out = out + agg_b[None, :, None, None]
    Hout, Wout = out.shape[-2], out.shape[-1]
    return out.reshape(B, OC, Hout, Wout), attn


if __name__ == "__main__":
    # Module config: in_channels=16, out_channels=8, kernel_size=3, stride=1,
    # padding=1, groups=1, reduction_factor=4 -> bottleneck=4, num_kernels=4, bias=True.
    B, C, H, W = 2, 16, 16, 16
    OC, KS, NK = 8, 3, 4
    reduction_factor = 4
    BN = C // reduction_factor
    stride, padding, dilation = 1, 1, 1
    temperature = 2.0

    key = jax.random.PRNGKey(0)
    keys = jax.random.split(key, 8)
    x = jax.random.normal(keys[0], (B, C, H, W), dtype=jnp.float32)
    params = {
        "parallel_kernels": jax.random.normal(keys[1], (NK, OC, C, KS, KS), jnp.float32),
        "parallel_biases": jax.random.normal(keys[2], (NK, OC), jnp.float32),
        "dense1_w": jax.random.normal(keys[3], (C, BN), jnp.float32) * 0.1,
        "dense1_b": jax.random.normal(keys[4], (1, BN), jnp.float32) * 0.1,
        "dense2_w": jax.random.normal(keys[5], (BN, NK), jnp.float32) * 0.1,
        "dense2_b": jax.random.normal(keys[6], (1, NK), jnp.float32) * 0.1,
    }

    out, attn = dynamic_conv2d_forward(
        x, temperature, params, stride=stride, padding=padding, dilation=dilation)
    out = jax.block_until_ready(out)
    attn = jax.block_until_ready(attn)

    ref_out, ref_attn = _reference(
        x, temperature, params, stride=stride, padding=padding, dilation=dilation)

    assert out.shape == (B, OC, H, W), out.shape
    assert bool(jnp.allclose(attn, ref_attn, atol=1e-3, rtol=1e-3)), "attention mismatch"
    # Conv path runs in bf16 on the MXU (f32 accumulation); tolerances sized for
    # bf16 inputs + bf16 aggregated weights contracted over C*ks*ks = 144 terms.
    assert bool(jnp.allclose(out, ref_out, atol=2e-1, rtol=5e-2)), "conv output mismatch"
    rel_err = jnp.linalg.norm(out - ref_out) / jnp.linalg.norm(ref_out)
    assert float(rel_err) < 1e-2, f"conv relative error too large: {float(rel_err)}"
    print("KERNEL_OK")
</pallas_src>

<mosaic_0001>
module attributes {stable_mosaic.version = 11 : i64} {
  func.func @_attention_agg_kernel(%arg0: memref<2x16xf32, #tpu.memory_space<vmem>>, %arg1: memref<16x4xf32, #tpu.memory_space<vmem>>, %arg2: memref<1x4xf32, #tpu.memory_space<vmem>>, %arg3: memref<4x4xf32, #tpu.memory_space<vmem>>, %arg4: memref<1x4xf32, #tpu.memory_space<vmem>>, %arg5: memref<4x1152xbf16, #tpu.memory_space<vmem>>, %arg6: memref<4x8xf32, #tpu.memory_space<vmem>>, %arg7: memref<2x4xf32, #tpu.memory_space<vmem>>, %arg8: memref<2x1152xbf16, #tpu.memory_space<vmem>>, %arg9: memref<2x8xf32, #tpu.memory_space<vmem>>) attributes {dimension_semantics = [], scalar_prefetch = 0 : i64, scratch_operands = 0 : i64, tpu.core_type = #tpu.core_type<tc>} {
    %c0 = arith.constant 0 : index
    %c0_0 = arith.constant 0 : index
    %0 = vector.load %arg0[%c0, %c0_0] : memref<2x16xf32, #tpu.memory_space<vmem>>, vector<2x16xf32>
    %c0_1 = arith.constant 0 : index
    %c0_2 = arith.constant 0 : index
    %1 = vector.load %arg1[%c0_1, %c0_2] : memref<16x4xf32, #tpu.memory_space<vmem>>, vector<16x4xf32>
    %cst = arith.constant dense<0.000000e+00> : vector<2x4xf32>
    %2 = tpu.matmul %0, %1, %cst {dimension_numbers = #tpu.dot_dimension_numbers<[1], [0], [0], [1], [0, 0, 1, 1], [], []>, precision = #tpu.contract_precision<fp32>} : vector<2x16xf32>, vector<16x4xf32>, vector<2x4xf32> -> vector<2x4xf32>
    %c0_3 = arith.constant 0 : index
    %c0_4 = arith.constant 0 : index
    %3 = vector.load %arg2[%c0_3, %c0_4] : memref<1x4xf32, #tpu.memory_space<vmem>>, vector<1x4xf32>
    %4 = vector.broadcast %3 : vector<1x4xf32> to vector<2x4xf32>
    %5 = arith.addf %2, %4 : vector<2x4xf32>
    %cst_5 = arith.constant 0.000000e+00 : f32
    %6 = vector.broadcast %cst_5 : f32 to vector<2x4xf32>
    %7 = arith.maximumf %5, %6 : vector<2x4xf32>
    %c0_6 = arith.constant 0 : index
    %c0_7 = arith.constant 0 : index
    %8 = vector.load %arg3[%c0_6, %c0_7] : memref<4x4xf32, #tpu.memory_space<vmem>>, vector<4x4xf32>
    %cst_8 = arith.constant dense<0.000000e+00> : vector<2x4xf32>
    %9 = tpu.matmul %7, %8, %cst_8 {dimension_numbers = #tpu.dot_dimension_numbers<[1], [0], [0], [1], [0, 0, 1, 1], [], []>, precision = #tpu.contract_precision<fp32>} : vector<2x4xf32>, vector<4x4xf32>, vector<2x4xf32> -> vector<2x4xf32>
    %c0_9 = arith.constant 0 : index
    %c0_10 = arith.constant 0 : index
    %10 = vector.load %arg4[%c0_9, %c0_10] : memref<1x4xf32, #tpu.memory_space<vmem>>, vector<1x4xf32>
    %11 = vector.broadcast %10 : vector<1x4xf32> to vector<2x4xf32>
    %12 = arith.addf %9, %11 : vector<2x4xf32>
    %cst_11 = arith.constant dense<0xFF800000> : vector<2xf32>
    %13 = vector.multi_reduction <maximumf>, %12, %cst_11 [1] : vector<2x4xf32> to vector<2xf32>
    %14 = vector.shape_cast %13 : vector<2xf32> to vector<2x1xf32>
    %15 = vector.broadcast %14 : vector<2x1xf32> to vector<2x4xf32>
    %16 = arith.subf %12, %15 : vector<2x4xf32>
    %17 = math.exp %16 : vector<2x4xf32>
    %cst_12 = arith.constant dense<0.000000e+00> : vector<2xf32>
    %18 = vector.multi_reduction <add>, %17, %cst_12 [1] : vector<2x4xf32> to vector<2xf32>
    %19 = vector.shape_cast %18 : vector<2xf32> to vector<2x1xf32>
    %20 = vector.broadcast %19 : vector<2x1xf32> to vector<2x4xf32>
    %21 = arith.divf %17, %20 : vector<2x4xf32>
    %c0_13 = arith.constant 0 : index
    %c0_14 = arith.constant 0 : index
    %22 = vector.load %arg7[%c0_13, %c0_14] : memref<2x4xf32, #tpu.memory_space<vmem>>, vector<2x4xf32>
    tpu.vector_store %arg7[%c0_13, %c0_14], %21 {strides = array<i32>} : memref<2x4xf32, #tpu.memory_space<vmem>>, vector<2x4xf32>,
    %c0_15 = arith.constant 0 : index
    %c0_16 = arith.constant 0 : index
    %23 = vector.load %arg5[%c0_15, %c0_16] : memref<4x1152xbf16, #tpu.memory_space<vmem>>, vector<4x1152xbf16>
    %cst_17 = arith.constant dense<0.000000e+00> : vector<2x1152xf32>
    %24 = tpu.matmul %21, %23, %cst_17 {dimension_numbers = #tpu.dot_dimension_numbers<[1], [0], [0], [1], [0, 0, 1, 1], [], []>} : vector<2x4xf32>, vector<4x1152xbf16>, vector<2x1152xf32> -> vector<2x1152xf32>
    %25 = arith.truncf %24 : vector<2x1152xf32> to vector<2x1152xbf16>
    %c0_18 = arith.constant 0 : index
    %c0_19 = arith.constant 0 : index
    %26 = vector.load %arg8[%c0_18, %c0_19] : memref<2x1152xbf16, #tpu.memory_space<vmem>>, vector<2x1152xbf16>
    tpu.vector_store %arg8[%c0_18, %c0_19], %25 {strides = array<i32>} : memref<2x1152xbf16, #tpu.memory_space<vmem>>, vector<2x1152xbf16>,
    %c0_20 = arith.constant 0 : index
    %c0_21 = arith.constant 0 : index
    %27 = vector.load %arg6[%c0_20, %c0_21] : memref<4x8xf32, #tpu.memory_space<vmem>>, vector<4x8xf32>
    %cst_22 = arith.constant dense<0.000000e+00> : vector<2x8xf32>
    %28 = tpu.matmul %21, %27, %cst_22 {dimension_numbers = #tpu.dot_dimension_numbers<[1], [0], [0], [1], [0, 0, 1, 1], [], []>} : vector<2x4xf32>, vector<4x8xf32>, vector<2x8xf32> -> vector<2x8xf32>
    %c0_23 = arith.constant 0 : index
    %c0_24 = arith.constant 0 : index
    %29 = vector.load %arg9[%c0_23, %c0_24] : memref<2x8xf32, #tpu.memory_space<vmem>>, vector<2x8xf32>
    tpu.vector_store %arg9[%c0_23, %c0_24], %28 {strides = array<i32>} : memref<2x8xf32, #tpu.memory_space<vmem>>, vector<2x8xf32>,
    return
  }
}

</mosaic_0001>

<llo_original>
// kernel: tpu_custom_call.1
$region0: #{tpu_custom_call.1}
  #allocation0 [shape = 'u32[]', space=smem, size = 0x4, offset = 0x4, fixed_abs, tag = 'smem constant byte address 0x4 - core index']
  #allocation1 [shape = 'u32[144,128]{1,0:T(1,128)}', space=vmem, size = 0x12000, scoped, tag = 'internal scratch']
  %s0 = inlined_call_operand.vmem [shape: f32[2,16], index: 0, kind: input, shape index: {}]
  %s1 = inlined_call_operand.vmem [shape: f32[16,4], index: 1, kind: input, shape index: {}]
  %s2 = inlined_call_operand.vmem [shape: f32[1,4], index: 2, kind: input, shape index: {}]
  %s3 = inlined_call_operand.vmem [shape: f32[4,4], index: 3, kind: input, shape index: {}]
  %s4 = inlined_call_operand.vmem [shape: f32[1,4], index: 4, kind: input, shape index: {}]
  %s5 = inlined_call_operand.vmem [shape: bf16[4,1152], index: 5, kind: input, shape index: {}]
  %s6 = inlined_call_operand.vmem [shape: f32[4,8], index: 6, kind: input, shape index: {}]
  %s7 = inlined_call_operand.hbm [shape: f32[2,4], index: 7, kind: output, shape index: {0}]
  %s8 = inlined_call_operand.hbm [shape: bf16[2,1152], index: 8, kind: output, shape index: {1}]
  %s9 = inlined_call_operand.hbm [shape: f32[2,8], index: 9, kind: output, shape index: {2}]
  %10 = xla_tuple %s7, %s8, %s9
  %s11 = sld [smem:[#allocation0]]
  $region54: #{tpu_custom_call.1} parent=0
    _
  %s13 = ssub.s32 1, %s11
  %s14 = scalar_select 0, %s13, %s11
  $region1: #{tpu_custom_call.1} parent=0
    #allocation2 [shape = 'u8[1024]{0}', space=vmem, size = 0x400, scoped, tag = 'output window, operand 0, single buffered']
    #allocation3 [shape = 's32[1]{0}', space=sflag, size = 0x4, scoped, tag = 'scoped memory for tpu_custom_call.1']
    #allocation4 [shape = 'u8[4608]{0}', space=vmem, size = 0x1400, scoped, tag = 'output window, operand 1, single buffered']
    #allocation5 [shape = 's32[1]{0}', space=sflag, size = 0x4, scoped, tag = 'scoped memory for tpu_custom_call.1']
    #allocation6 [shape = 'u8[1024]{0}', space=vmem, size = 0x400, scoped, tag = 'output window, operand 2, single buffered']
    %15 = vsyncpa [#allocation3], 0
    %16 = vsyncpa [#allocation5], 0
    // Predicated region
    $region2: #{tpu_custom_call.1} parent=1 // pred_check
      _
    $region3: #{tpu_custom_call.1} parent=1 // pred_check_branch
      %18 = sbr.rel (0) target = $region5
    $region4: #{tpu_custom_call.1} parent=1 // pred_region
      _
    $region5: #{tpu_custom_call.1} parent=1 // pred_fallthru
      _
    // Predicated region
    $region6: #{tpu_custom_call.1} parent=1 // pred_check
      _
    $region7: #{tpu_custom_call.1} parent=1 // pred_check_branch
      %20 = sbr.rel (0) target = $region9
    $region8: #{tpu_custom_call.1} parent=1 // pred_region
      _
    $region9: #{tpu_custom_call.1} parent=1 // pred_fallthru
      _
    // Predicated region
    $region10: #{tpu_custom_call.1} parent=1 // pred_check
      _
    $region11: #{tpu_custom_call.1} parent=1 // pred_check_branch
      %22 = sbr.rel (0) target = $region13
    $region12: #{tpu_custom_call.1} parent=1 // pred_region
      _
    $region13: #{tpu_custom_call.1} parent=1 // pred_fallthru
      _
    // Predicated region
    $region14: #{tpu_custom_call.1} parent=1 // pred_check
      _
    $region15: #{tpu_custom_call.1} parent=1 // pred_check_branch
      %24 = sbr.rel (0) target = $region17
    $region16: #{tpu_custom_call.1} parent=1 // pred_region
      _
    $region17: #{tpu_custom_call.1} parent=1 // pred_fallthru
      _
    // Predicated region
    $region18: #{tpu_custom_call.1} parent=1 // pred_check
      _
    $region19: #{tpu_custom_call.1} parent=1 // pred_check_branch
      %26 = sbr.rel (0) target = $region21
    $region20: #{tpu_custom_call.1} parent=1 // pred_region
      _
    $region21: #{tpu_custom_call.1} parent=1 // pred_fallthru
      _
    // Predicated region
    $region22: #{tpu_custom_call.1} parent=1 // pred_check
      _
    $region23: #{tpu_custom_call.1} parent=1 // pred_check_branch
      %28 = sbr.rel (0) target = $region25
    $region24: #{tpu_custom_call.1} parent=1 // pred_region
      _
    $region25: #{tpu_custom_call.1} parent=1 // pred_fallthru
      _
    // Predicated region
    $region26: #{tpu_custom_call.1} parent=1 // pred_check
      _
    $region27: #{tpu_custom_call.1} parent=1 // pred_check_branch
      %30 = sbr.rel (0) target = $region29
    $region28: #{tpu_custom_call.1} parent=1 // pred_region
      _
    $region29: #{tpu_custom_call.1} parent=1 // pred_fallthru
      _
    %v32 = vld [vmem:[%s0] sm:$0x3]
    %v33 = vld [vmem:[%s1] sm:$0xff]
    %v34 = vld [vmem:[%s1 + $0x8] sm:$0xff]
    %v35 = vld [vmem:[%s2] sm:$0x1]
    %v37 = vlaneseq
    %v38 = vshrl.u32 %v37, 7
    %v39 = vsub.s32 0, %v38
    %v40 = vrot.slane %v35, %v39
    %vm42 = vcmask 130048
    %v44 = vsel %vm42, %v32, 0
    %46 = vmatprep.subr.mxu0 0.0
    %v47 = vand.u32 %v33, 4294901760
    %48 = vmatpush1.msra.mxu0 %v47
    %49 = vmatprep.subr.mxu0 0.0
    %v50 = vand.u32 %v34, 4294901760
    %51 = vmatpush1.msra.mxu0 %v50
    %52 = vmatprep.subr.mxu0 0.0
    %53 = vmatpush1.msra.mxu0 0.0
    %54 = vmatprep.subr.mxu0 0.0
    %55 = vmatpush1.msra.mxu0 0.0
    %56 = vmatprep.subr.mxu0 0.0
    %57 = vmatpush1.msra.mxu0 0.0
    %58 = vmatprep.subr.mxu0 0.0
    %59 = vmatpush1.msra.mxu0 0.0
    %60 = vmatprep.subr.mxu0 0.0
    %61 = vmatpush1.msra.mxu0 0.0
    %62 = vmatprep.subr.mxu0 0.0
    %63 = vmatpush1.msra.mxu0 0.0
    %64 = vmatprep.subr.mxu0 0.0
    %65 = vmatpush1.msra.mxu0 0.0
    %66 = vmatprep.subr.mxu0 0.0
    %67 = vmatpush1.msra.mxu0 0.0
    %68 = vmatprep.subr.mxu0 0.0
    %69 = vmatpush1.msra.mxu0 0.0
    %70 = vmatprep.subr.mxu0 0.0
    %71 = vmatpush1.msra.mxu0 0.0
    %72 = vmatprep.subr.mxu0 0.0
    %73 = vmatpush1.msra.mxu0 0.0
    %74 = vmatprep.subr.mxu0 0.0
    %75 = vmatpush1.msra.mxu0 0.0
    %76 = vmatprep.subr.mxu0 0.0
    %77 = vmatpush1.msra.mxu0 0.0
    %78 = vmatprep.subr.mxu0 0.0
    %79 = vmatpush1.msra.mxu0 0.0
    %80 = vmatprep.subr.mxu0 0.0
    %81 = vmatpush1.msra.mxu0 0.0
    %82 = vmatprep.subr.mxu0 0.0
    %83 = vmatpush1.msra.mxu0 0.0
    %84 = vmatprep.subr.mxu0 0.0
    %85 = vmatpush1.msra.mxu0 0.0
    %86 = vmatprep.subr.mxu0 0.0
    %87 = vmatpush1.msra.mxu0 0.0
    %88 = vmatprep.subr.mxu0 0.0
    %89 = vmatpush1.msra.mxu0 0.0
    %90 = vmatprep.subr.mxu0 0.0
    %91 = vmatpush1.msra.mxu0 0.0
    %92 = vmatprep.subr.mxu0 0.0
    %93 = vmatpush1.msra.mxu0 0.0
    %94 = vmatprep.subr.mxu0 0.0
    %95 = vmatpush1.msra.mxu0 0.0
    %96 = vmatprep.subr.mxu0 0.0
    %97 = vmatpush1.msra.mxu0 0.0
    %98 = vmatprep.subr.mxu0 0.0
    %99 = vmatpush1.msra.mxu0 0.0
    %100 = vmatprep.subr.mxu0 0.0
    %101 = vmatpush1.msra.mxu0 0.0
    %102 = vmatprep.subr.mxu0 0.0
    %103 = vmatpush1.msra.mxu0 0.0
    %104 = vmatprep.subr.mxu0 0.0
    %105 = vmatpush1.msra.mxu0 0.0
    %106 = vmatprep.subr.mxu0 0.0
    %107 = vmatpush1.msra.mxu0 0.0
    %108 = vmatprep.subr.mxu0 0.0
    %109 = vmatpush1.msra.mxu0 0.0
    %110 = vmatprep.subr.mxu0 0.0
    %111 = vmatpush1.msra.mxu0 0.0
    %112 = vmatprep.mubr.f32.mxu0 0.0
    %v113 = vand.u32 %v44, 4294901760
    %v114 = vsub.f32 %v44, %v113
    %v115 = vand.u32 %v114, 4294901760
    %v116 = vsub.f32 %v114, %v115
    %v117 = vand.u32 %v116, 4294901760
    %118 = vmatmul.mubr.f32.gmra.mrb[0].mxu0 %v117
    %v119 = vpop.f32.mrb[0].mxu0
    %v120 = vadd.f32 %v40, %v119
    %v121 = vpop.f32.mrb[0].mxu0
    %122 = vdwg.mxu0
    %123 = vmatprep.subr.mxu0 0.0
    %v124 = vand.u32 %v33, 4294901760
    %v125 = vsub.f32 %v33, %v124
    %v126 = vand.u32 %v125, 4294901760
    %v127 = vsub.f32 %v125, %v126
    %v128 = vand.u32 %v127, 4294901760
    %129 = vmatpush1.msra.mxu0 %v128
    %130 = vmatprep.subr.mxu0 0.0
    %v131 = vand.u32 %v34, 4294901760
    %v132 = vsub.f32 %v34, %v131
    %v133 = vand.u32 %v132, 4294901760
    %v134 = vsub.f32 %v132, %v133
    %v135 = vand.u32 %v134, 4294901760
    %136 = vmatpush1.msra.mxu0 %v135
    %137 = vmatprep.subr.mxu0 0.0
    %138 = vmatpush1.msra.mxu0 0.0
    %139 = vmatprep.subr.mxu0 0.0
    %140 = vmatpush1.msra.mxu0 0.0
    %141 = vmatprep.subr.mxu0 0.0
    %142 = vmatpush1.msra.mxu0 0.0
    %143 = vmatprep.subr.mxu0 0.0
    %144 = vmatpush1.msra.mxu0 0.0
    %145 = vmatprep.subr.mxu0 0.0
    %146 = vmatpush1.msra.mxu0 0.0
    %147 = vmatprep.subr.mxu0 0.0
    %148 = vmatpush1.msra.mxu0 0.0
    %149 = vmatprep.subr.mxu0 0.0
    %150 = vmatpush1.msra.mxu0 0.0
    %151 = vmatprep.subr.mxu0 0.0
    %152 = vmatpush1.msra.mxu0 0.0
    %153 = vmatprep.subr.mxu0 0.0
    %154 = vmatpush1.msra.mxu0 0.0
    %155 = vmatprep.subr.mxu0 0.0
    %156 = vmatpush1.msra.mxu0 0.0
    %157 = vmatprep.subr.mxu0 0.0
    %158 = vmatpush1.msra.mxu0 0.0
    %159 = vmatprep.subr.mxu0 0.0
    %160 = vmatpush1.msra.mxu0 0.0
    %161 = vmatprep.subr.mxu0 0.0
    %162 = vmatpush1.msra.mxu0 0.0
    %163 = vmatprep.subr.mxu0 0.0
    %164 = vmatpush1.msra.mxu0 0.0
    %165 = vmatprep.subr.mxu0 0.0
    %166 = vmatpush1.msra.mxu0 0.0
    %167 = vmatprep.subr.mxu0 0.0
    %168 = vmatpush1.msra.mxu0 0.0
    %169 = vmatprep.subr.mxu0 0.0
    %170 = vmatpush1.msra.mxu0 0.0
    %171 = vmatprep.subr.mxu0 0.0
    %172 = vmatpush1.msra.mxu0 0.0
    %173 = vmatprep.subr.mxu0 0.0
    %174 = vmatpush1.msra.mxu0 0.0
    %175 = vmatprep.subr.mxu0 0.0
    %176 = vmatpush1.msra.mxu0 0.0
    %177 = vmatprep.subr.mxu0 0.0
    %178 = vmatpush1.msra.mxu0 0.0
    %179 = vmatprep.subr.mxu0 0.0
    %180 = vmatpush1.msra.mxu0 0.0
    %181 = vmatprep.subr.mxu0 0.0
    %182 = vmatpush1.msra.mxu0 0.0
    %183 = vmatprep.subr.mxu0 0.0
    %184 = vmatpush1.msra.mxu0 0.0
    %185 = vmatprep.subr.mxu0 0.0
    %186 = vmatpush1.msra.mxu0 0.0
    %187 = vmatprep.subr.mxu0 0.0
    %188 = vmatpush1.msra.mxu0 0.0
    %189 = vmatprep.subr.mxu0 0.0
    %190 = vmatpush1.msra.mxu0 0.0
    %191 = vmatprep.subr.mxu0 0.0
    %192 = vmatpush1.msra.mxu0 0.0
    %193 = vmatprep.subr.mxu0 0.0
    %194 = vmatpush1.msra.mxu0 0.0
    %195 = vmatprep.subr.mxu0 0.0
    %196 = vmatpush1.msra.mxu0 0.0
    %197 = vmatprep.mubr.f32.mxu0 0.0
    %v198 = vand.u32 %v44, 4294901760
    %199 = vmatmul.mubr.f32.gmra.mrb[0].mxu0 %v198
    %v200 = vpop.f32.mrb[0].mxu0
    %v201 = vadd.f32 %v120, %v200
    %v202 = vpop.f32.mrb[0].mxu0
    %203 = vdwg.mxu0
    %204 = vmatprep.subr.mxu0 0.0
    %v205 = vand.u32 %v33, 4294901760
    %v206 = vsub.f32 %v33, %v205
    %207 = vmatpush1.msra.mxu0 %v206
    %208 = vmatprep.subr.mxu0 0.0
    %v209 = vand.u32 %v34, 4294901760
    %v210 = vsub.f32 %v34, %v209
    %211 = vmatpush1.msra.mxu0 %v210
    %212 = vmatprep.subr.mxu0 0.0
    %213 = vmatpush1.msra.mxu0 0.0
    %214 = vmatprep.subr.mxu0 0.0
    %215 = vmatpush1.msra.mxu0 0.0
    %216 = vmatprep.subr.mxu0 0.0
    %217 = vmatpush1.msra.mxu0 0.0
    %218 = vmatprep.subr.mxu0 0.0
    %219 = vmatpush1.msra.mxu0 0.0
    %220 = vmatprep.subr.mxu0 0.0
    %221 = vmatpush1.msra.mxu0 0.0
    %222 = vmatprep.subr.mxu0 0.0
    %223 = vmatpush1.msra.mxu0 0.0
    %224 = vmatprep.subr.mxu0 0.0
    %225 = vmatpush1.msra.mxu0 0.0
    %226 = vmatprep.subr.mxu0 0.0
    %227 = vmatpush1.msra.mxu0 0.0
    %228 = vmatprep.subr.mxu0 0.0
    %229 = vmatpush1.msra.mxu0 0.0
    %230 = vmatprep.subr.mxu0 0.0
    %231 = vmatpush1.msra.mxu0 0.0
    %232 = vmatprep.subr.mxu0 0.0
    %233 = vmatpush1.msra.mxu0 0.0
    %234 = vmatprep.subr.mxu0 0.0
    %235 = vmatpush1.msra.mxu0 0.0
    %236 = vmatprep.subr.mxu0 0.0
    %237 = vmatpush1.msra.mxu0 0.0
    %238 = vmatprep.subr.mxu0 0.0
    %239 = vmatpush1.msra.mxu0 0.0
    %240 = vmatprep.subr.mxu0 0.0
    %241 = vmatpush1.msra.mxu0 0.0
    %242 = vmatprep.subr.mxu0 0.0
    %243 = vmatpush1.msra.mxu0 0.0
    %244 = vmatprep.subr.mxu0 0.0
    %245 = vmatpush1.msra.mxu0 0.0
    %246 = vmatprep.subr.mxu0 0.0
    %247 = vmatpush1.msra.mxu0 0.0
    %248 = vmatprep.subr.mxu0 0.0
    %249 = vmatpush1.msra.mxu0 0.0
    %250 = vmatprep.subr.mxu0 0.0
    %251 = vmatpush1.msra.mxu0 0.0
    %252 = vmatprep.subr.mxu0 0.0
    %253 = vmatpush1.msra.mxu0 0.0
    %254 = vmatprep.subr.mxu0 0.0
    %255 = vmatpush1.msra.mxu0 0.0
    %256 = vmatprep.subr.mxu0 0.0
    %257 = vmatpush1.msra.mxu0 0.0
    %258 = vmatprep.subr.mxu0 0.0
    %259 = vmatpush1.msra.mxu0 0.0
    %260 = vmatprep.subr.mxu0 0.0
    %261 = vmatpush1.msra.mxu0 0.0
    %262 = vmatprep.subr.mxu0 0.0
    %263 = vmatpush1.msra.mxu0 0.0
    %264 = vmatprep.subr.mxu0 0.0
    %265 = vmatpush1.msra.mxu0 0.0
    %266 = vmatprep.subr.mxu0 0.0
    %267 = vmatpush1.msra.mxu0 0.0
    %268 = vmatprep.subr.mxu0 0.0
    %269 = vmatpush1.msra.mxu0 0.0
    %270 = vmatprep.subr.mxu0 0.0
    %271 = vmatpush1.msra.mxu0 0.0
    %272 = vmatprep.mubr.f32.mxu0 0.0
    %v273 = vand.u32 %v44, 4294901760
    %v274 = vsub.f32 %v44, %v273
    %275 = vmatmul.mubr.f32.gmra.mrb[0].mxu0 %v274
    %v276 = vpop.f32.mrb[0].mxu0
    %v277 = vadd.f32 %v201, %v276
    %v278 = vpop.f32.mrb[0].mxu0
    %279 = vdwg.mxu0
    %280 = vmatprep.subr.mxu0 0.0
    %v281 = vand.u32 %v33, 4294901760
    %282 = vmatpush1.msra.mxu0 %v281
    %283 = vmatprep.subr.mxu0 0.0
    %v284 = vand.u32 %v34, 4294901760
    %285 = vmatpush1.msra.mxu0 %v284
    %286 = vmatprep.subr.mxu0 0.0
    %287 = vmatpush1.msra.mxu0 0.0
    %288 = vmatprep.subr.mxu0 0.0
    %289 = vmatpush1.msra.mxu0 0.0
    %290 = vmatprep.subr.mxu0 0.0
    %291 = vmatpush1.msra.mxu0 0.0
    %292 = vmatprep.subr.mxu0 0.0
    %293 = vmatpush1.msra.mxu0 0.0
    %294 = vmatprep.subr.mxu0 0.0
    %295 = vmatpush1.msra.mxu0 0.0
    %296 = vmatprep.subr.mxu0 0.0
    %297 = vmatpush1.msra.mxu0 0.0
    %298 = vmatprep.subr.mxu0 0.0
    %299 = vmatpush1.msra.mxu0 0.0
    %300 = vmatprep.subr.mxu0 0.0
    %301 = vmatpush1.msra.mxu0 0.0
    %302 = vmatprep.subr.mxu0 0.0
    %303 = vmatpush1.msra.mxu0 0.0
    %304 = vmatprep.subr.mxu0 0.0
    %305 = vmatpush1.msra.mxu0 0.0
    %306 = vmatprep.subr.mxu0 0.0
    %307 = vmatpush1.msra.mxu0 0.0
    %308 = vmatprep.subr.mxu0 0.0
    %309 = vmatpush1.msra.mxu0 0.0
    %310 = vmatprep.subr.mxu0 0.0
    %311 = vmatpush1.msra.mxu0 0.0
    %312 = vmatprep.subr.mxu0 0.0
    %313 = vmatpush1.msra.mxu0 0.0
    %314 = vmatprep.subr.mxu0 0.0
    %315 = vmatpush1.msra.mxu0 0.0
    %316 = vmatprep.subr.mxu0 0.0
    %317 = vmatpush1.msra.mxu0 0.0
    %318 = vmatprep.subr.mxu0 0.0
    %319 = vmatpush1.msra.mxu0 0.0
    %320 = vmatprep.subr.mxu0 0.0
    %321 = vmatpush1.msra.mxu0 0.0
    %322 = vmatprep.subr.mxu0 0.0
    %323 = vmatpush1.msra.mxu0 0.0
    %324 = vmatprep.subr.mxu0 0.0
    %325 = vmatpush1.msra.mxu0 0.0
    %326 = vmatprep.subr.mxu0 0.0
    %327 = vmatpush1.msra.mxu0 0.0
    %328 = vmatprep.subr.mxu0 0.0
    %329 = vmatpush1.msra.mxu0 0.0
    %330 = vmatprep.subr.mxu0 0.0
    %331 = vmatpush1.msra.mxu0 0.0
    %332 = vmatprep.subr.mxu0 0.0
    %333 = vmatpush1.msra.mxu0 0.0
    %334 = vmatprep.subr.mxu0 0.0
    %335 = vmatpush1.msra.mxu0 0.0
    %336 = vmatprep.subr.mxu0 0.0
    %337 = vmatpush1.msra.mxu0 0.0
    %338 = vmatprep.subr.mxu0 0.0
    %339 = vmatpush1.msra.mxu0 0.0
    %340 = vmatprep.subr.mxu0 0.0
    %341 = vmatpush1.msra.mxu0 0.0
    %342 = vmatprep.subr.mxu0 0.0
    %343 = vmatpush1.msra.mxu0 0.0
    %344 = vmatprep.subr.mxu0 0.0
    %345 = vmatpush1.msra.mxu0 0.0
    %346 = vmatprep.mubr.f32.mxu0 0.0
    %v347 = vand.u32 %v44, 4294901760
    %v348 = vsub.f32 %v44, %v347
    %v349 = vand.u32 %v348, 4294901760
    %350 = vmatmul.mubr.f32.gmra.mrb[0].mxu0 %v349
    %v351 = vpop.f32.mrb[0].mxu0
    %v352 = vadd.f32 %v277, %v351
    %v353 = vpop.f32.mrb[0].mxu0
    %354 = vdwg.mxu0
    %355 = vmatprep.subr.mxu0 0.0
    %v356 = vand.u32 %v33, 4294901760
    %v357 = vsub.f32 %v33, %v356
    %v358 = vand.u32 %v357, 4294901760
    %359 = vmatpush1.msra.mxu0 %v358
    %360 = vmatprep.subr.mxu0 0.0
    %v361 = vand.u32 %v34, 4294901760
    %v362 = vsub.f32 %v34, %v361
    %v363 = vand.u32 %v362, 4294901760
    %364 = vmatpush1.msra.mxu0 %v363
    %365 = vmatprep.subr.mxu0 0.0
    %366 = vmatpush1.msra.mxu0 0.0
    %367 = vmatprep.subr.mxu0 0.0
    %368 = vmatpush1.msra.mxu0 0.0
    %369 = vmatprep.subr.mxu0 0.0
    %370 = vmatpush1.msra.mxu0 0.0
    %371 = vmatprep.subr.mxu0 0.0
    %372 = vmatpush1.msra.mxu0 0.0
    %373 = vmatprep.subr.mxu0 0.0
    %374 = vmatpush1.msra.mxu0 0.0
    %375 = vmatprep.subr.mxu0 0.0
    %376 = vmatpush1.msra.mxu0 0.0
    %377 = vmatprep.subr.mxu0 0.0
    %378 = vmatpush1.msra.mxu0 0.0
    %379 = vmatprep.subr.mxu0 0.0
    %380 = vmatpush1.msra.mxu0 0.0
    %381 = vmatprep.subr.mxu0 0.0
    %382 = vmatpush1.msra.mxu0 0.0
    %383 = vmatprep.subr.mxu0 0.0
    %384 = vmatpush1.msra.mxu0 0.0
    %385 = vmatprep.subr.mxu0 0.0
    %386 = vmatpush1.msra.mxu0 0.0
    %387 = vmatprep.subr.mxu0 0.0
    %388 = vmatpush1.msra.mxu0 0.0
    %389 = vmatprep.subr.mxu0 0.0
    %390 = vmatpush1.msra.mxu0 0.0
    %391 = vmatprep.subr.mxu0 0.0
    %392 = vmatpush1.msra.mxu0 0.0
    %393 = vmatprep.subr.mxu0 0.0
    %394 = vmatpush1.msra.mxu0 0.0
    %395 = vmatprep.subr.mxu0 0.0
    %396 = vmatpush1.msra.mxu0 0.0
    %397 = vmatprep.subr.mxu0 0.0
    %398 = vmatpush1.msra.mxu0 0.0
    %399 = vmatprep.subr.mxu0 0.0
    %400 = vmatpush1.msra.mxu0 0.0
    %401 = vmatprep.subr.mxu0 0.0
    %402 = vmatpush1.msra.mxu0 0.0
    %403 = vmatprep.subr.mxu0 0.0
    %404 = vmatpush1.msra.mxu0 0.0
    %405 = vmatprep.subr.mxu0 0.0
    %406 = vmatpush1.msra.mxu0 0.0
    %407 = vmatprep.subr.mxu0 0.0
    %408 = vmatpush1.msra.mxu0 0.0
    %409 = vmatprep.subr.mxu0 0.0
    %410 = vmatpush1.msra.mxu0 0.0
    %411 = vmatprep.subr.mxu0 0.0
    %412 = vmatpush1.msra.mxu0 0.0
    %413 = vmatprep.subr.mxu0 0.0
    %414 = vmatpush1.msra.mxu0 0.0
    %415 = vmatprep.subr.mxu0 0.0
    %416 = vmatpush1.msra.mxu0 0.0
    %417 = vmatprep.subr.mxu0 0.0
    %418 = vmatpush1.msra.mxu0 0.0
    %419 = vmatprep.subr.mxu0 0.0
    %420 = vmatpush1.msra.mxu0 0.0
    %421 = vmatprep.subr.mxu0 0.0
    %422 = vmatpush1.msra.mxu0 0.0
    %423 = vmatprep.subr.mxu0 0.0
    %424 = vmatpush1.msra.mxu0 0.0
    %425 = vmatprep.mubr.f32.mxu0 0.0
    %v426 = vand.u32 %v44, 4294901760
    %427 = vmatmul.mubr.f32.gmra.mrb[0].mxu0 %v426
    %v428 = vpop.f32.mrb[0].mxu0
    %v429 = vadd.f32 %v352, %v428
    %v430 = vpop.f32.mrb[0].mxu0
    %431 = vdwg.mxu0
    %432 = vmatprep.subr.mxu0 0.0
    %v433 = vand.u32 %v33, 4294901760
    %434 = vmatpush1.msra.mxu0 %v433
    %435 = vmatprep.subr.mxu0 0.0
    %v436 = vand.u32 %v34, 4294901760
    %437 = vmatpush1.msra.mxu0 %v436
    %438 = vmatprep.subr.mxu0 0.0
    %439 = vmatpush1.msra.mxu0 0.0
    %440 = vmatprep.subr.mxu0 0.0
    %441 = vmatpush1.msra.mxu0 0.0
    %442 = vmatprep.subr.mxu0 0.0
    %443 = vmatpush1.msra.mxu0 0.0
    %444 = vmatprep.subr.mxu0 0.0
    %445 = vmatpush1.msra.mxu0 0.0
    %446 = vmatprep.subr.mxu0 0.0
    %447 = vmatpush1.msra.mxu0 0.0
    %448 = vmatprep.subr.mxu0 0.0
    %449 = vmatpush1.msra.mxu0 0.0
    %450 = vmatprep.subr.mxu0 0.0
    %451 = vmatpush1.msra.mxu0 0.0
    %452 = vmatprep.subr.mxu0 0.0
    %453 = vmatpush1.msra.mxu0 0.0
    %454 = vmatprep.subr.mxu0 0.0
    %455 = vmatpush1.msra.mxu0 0.0
    %456 = vmatprep.subr.mxu0 0.0
    %457 = vmatpush1.msra.mxu0 0.0
    %458 = vmatprep.subr.mxu0 0.0
    %459 = vmatpush1.msra.mxu0 0.0
    %460 = vmatprep.subr.mxu0 0.0
    %461 = vmatpush1.msra.mxu0 0.0
    %462 = vmatprep.subr.mxu0 0.0
    %463 = vmatpush1.msra.mxu0 0.0
    %464 = vmatprep.subr.mxu0 0.0
    %465 = vmatpush1.msra.mxu0 0.0
    %466 = vmatprep.subr.mxu0 0.0
    %467 = vmatpush1.msra.mxu0 0.0
    %468 = vmatprep.subr.mxu0 0.0
    %469 = vmatpush1.msra.mxu0 0.0
    %470 = vmatprep.subr.mxu0 0.0
    %471 = vmatpush1.msra.mxu0 0.0
    %472 = vmatprep.subr.mxu0 0.0
    %473 = vmatpush1.msra.mxu0 0.0
    %474 = vmatprep.subr.mxu0 0.0
    %475 = vmatpush1.msra.mxu0 0.0
    %476 = vmatprep.subr.mxu0 0.0
    %477 = vmatpush1.msra.mxu0 0.0
    %478 = vmatprep.subr.mxu0 0.0
    %479 = vmatpush1.msra.mxu0 0.0
    %480 = vmatprep.subr.mxu0 0.0
    %481 = vmatpush1.msra.mxu0 0.0
    %482 = vmatprep.subr.mxu0 0.0
    %483 = vmatpush1.msra.mxu0 0.0
    %484 = vmatprep.subr.mxu0 0.0
    %485 = vmatpush1.msra.mxu0 0.0
    %486 = vmatprep.subr.mxu0 0.0
    %487 = vmatpush1.msra.mxu0 0.0
    %488 = vmatprep.subr.mxu0 0.0
    %489 = vmatpush1.msra.mxu0 0.0
    %490 = vmatprep.subr.mxu0 0.0
    %491 = vmatpush1.msra.mxu0 0.0
    %492 = vmatprep.subr.mxu0 0.0
    %493 = vmatpush1.msra.mxu0 0.0
    %494 = vmatprep.subr.mxu0 0.0
    %495 = vmatpush1.msra.mxu0 0.0
    %496 = vmatprep.subr.mxu0 0.0
    %497 = vmatpush1.msra.mxu0 0.0
    %498 = vmatprep.mubr.f32.mxu0 0.0
    %v499 = vand.u32 %v44, 4294901760
    %500 = vmatmul.mubr.f32.gmra.mrb[0].mxu0 %v499
    %v501 = vpop.f32.mrb[0].mxu0
    %v502 = vadd.f32 %v429, %v501
    %v503 = vpop.f32.mrb[0].mxu0
    %504 = vdwg.mxu0
    %v505 = vmax.f32 %v502, 0.0
    %v506 = vld [vmem:[%s3] sm:$0xf]
    %v507 = vld [vmem:[%s4] sm:$0x1]
    %v509 = vlaneseq
    %v510 = vshrl.u32 %v509, 7
    %v511 = vsub.s32 0, %v510
    %v512 = vrot.slane %v507, %v511
    %vm514 = vcmask 31744
    %v516 = vsel %vm514, %v505, 0
    %vm518 = vcmask 1043456
    %v520 = vsel %vm518, %v506, 0
    %522 = vmatprep.subr.mxu0 0.0
    %v523 = vand.u32 %v520, 4294901760
    %524 = vmatpush1.msra.mxu0 %v523
    %525 = vmatprep.subr.mxu0 0.0
    %526 = vmatpush1.msra.mxu0 0.0
    %527 = vmatprep.subr.mxu0 0.0
    %528 = vmatpush1.msra.mxu0 0.0
    %529 = vmatprep.subr.mxu0 0.0
    %530 = vmatpush1.msra.mxu0 0.0
    %531 = vmatprep.subr.mxu0 0.0
    %532 = vmatpush1.msra.mxu0 0.0
    %533 = vmatprep.subr.mxu0 0.0
    %534 = vmatpush1.msra.mxu0 0.0
    %535 = vmatprep.subr.mxu0 0.0
    %536 = vmatpush1.msra.mxu0 0.0
    %537 = vmatprep.subr.mxu0 0.0
    %538 = vmatpush1.msra.mxu0 0.0
    %539 = vmatprep.subr.mxu0 0.0
    %540 = vmatpush1.msra.mxu0 0.0
    %541 = vmatprep.subr.mxu0 0.0
    %542 = vmatpush1.msra.mxu0 0.0
    %543 = vmatprep.subr.mxu0 0.0
    %544 = vmatpush1.msra.mxu0 0.0
    %545 = vmatprep.subr.mxu0 0.0
    %546 = vmatpush1.msra.mxu0 0.0
    %547 = vmatprep.subr.mxu0 0.0
    %548 = vmatpush1.msra.mxu0 0.0
    %549 = vmatprep.subr.mxu0 0.0
    %550 = vmatpush1.msra.mxu0 0.0
    %551 = vmatprep.subr.mxu0 0.0
    %552 = vmatpush1.msra.mxu0 0.0
    %553 = vmatprep.subr.mxu0 0.0
    %554 = vmatpush1.msra.mxu0 0.0
    %555 = vmatprep.subr.mxu0 0.0
    %556 = vmatpush1.msra.mxu0 0.0
    %557 = vmatprep.subr.mxu0 0.0
    %558 = vmatpush1.msra.mxu0 0.0
    %559 = vmatprep.subr.mxu0 0.0
    %560 = vmatpush1.msra.mxu0 0.0
    %561 = vmatprep.subr.mxu0 0.0
    %562 = vmatpush1.msra.mxu0 0.0
    %563 = vmatprep.subr.mxu0 0.0
    %564 = vmatpush1.msra.mxu0 0.0
    %565 = vmatprep.subr.mxu0 0.0
    %566 = vmatpush1.msra.mxu0 0.0
    %567 = vmatprep.subr.mxu0 0.0
    %568 = vmatpush1.msra.mxu0 0.0
    %569 = vmatprep.subr.mxu0 0.0
    %570 = vmatpush1.msra.mxu0 0.0
    %571 = vmatprep.subr.mxu0 0.0
    %572 = vmatpush1.msra.mxu0 0.0
    %573 = vmatprep.subr.mxu0 0.0
    %574 = vmatpush1.msra.mxu0 0.0
    %575 = vmatprep.subr.mxu0 0.0
    %576 = vmatpush1.msra.mxu0 0.0
    %577 = vmatprep.subr.mxu0 0.0
    %578 = vmatpush1.msra.mxu0 0.0
    %579 = vmatprep.subr.mxu0 0.0
    %580 = vmatpush1.msra.mxu0 0.0
    %581 = vmatprep.subr.mxu0 0.0
    %582 = vmatpush1.msra.mxu0 0.0
    %583 = vmatprep.subr.mxu0 0.0
    %584 = vmatpush1.msra.mxu0 0.0
    %585 = vmatprep.subr.mxu0 0.0
    %586 = vmatpush1.msra.mxu0 0.0
    %587 = vmatprep.mubr.f32.mxu0 0.0
    %v588 = vand.u32 %v516, 4294901760
    %v589 = vsub.f32 %v516, %v588
    %v590 = vand.u32 %v589, 4294901760
    %v591 = vsub.f32 %v589, %v590
    %v592 = vand.u32 %v591, 4294901760
    %593 = vmatmul.mubr.f32.gmra.mrb[0].mxu0 %v592
    %v594 = vpop.f32.mrb[0].mxu0
    %v595 = vadd.f32 %v512, %v594
    %v596 = vpop.f32.mrb[0].mxu0
    %597 = vdwg.mxu0
    %598 = vmatprep.subr.mxu0 0.0
    %v599 = vand.u32 %v520, 4294901760
    %v600 = vsub.f32 %v520, %v599
    %v601 = vand.u32 %v600, 4294901760
    %v602 = vsub.f32 %v600, %v601
    %v603 = vand.u32 %v602, 4294901760
    %604 = vmatpush1.msra.mxu0 %v603
    %605 = vmatprep.subr.mxu0 0.0
    %606 = vmatpush1.msra.mxu0 0.0
    %607 = vmatprep.subr.mxu0 0.0
    %608 = vmatpush1.msra.mxu0 0.0
    %609 = vmatprep.subr.mxu0 0.0
    %610 = vmatpush1.msra.mxu0 0.0
    %611 = vmatprep.subr.mxu0 0.0
    %612 = vmatpush1.msra.mxu0 0.0
    %613 = vmatprep.subr.mxu0 0.0
    %614 = vmatpush1.msra.mxu0 0.0
    %615 = vmatprep.subr.mxu0 0.0
    %616 = vmatpush1.msra.mxu0 0.0
    %617 = vmatprep.subr.mxu0 0.0
    %618 = vmatpush1.msra.mxu0 0.0
    %619 = vmatprep.subr.mxu0 0.0
    %620 = vmatpush1.msra.mxu0 0.0
    %621 = vmatprep.subr.mxu0 0.0
    %622 = vmatpush1.msra.mxu0 0.0
    %623 = vmatprep.subr.mxu0 0.0
    %624 = vmatpush1.msra.mxu0 0.0
    %625 = vmatprep.subr.mxu0 0.0
    %626 = vmatpush1.msra.mxu0 0.0
    %627 = vmatprep.subr.mxu0 0.0
    %628 = vmatpush1.msra.mxu0 0.0
    %629 = vmatprep.subr.mxu0 0.0
    %630 = vmatpush1.msra.mxu0 0.0
    %631 = vmatprep.subr.mxu0 0.0
    %632 = vmatpush1.msra.mxu0 0.0
    %633 = vmatprep.subr.mxu0 0.0
    %634 = vmatpush1.msra.mxu0 0.0
    %635 = vmatprep.subr.mxu0 0.0
    %636 = vmatpush1.msra.mxu0 0.0
    %637 = vmatprep.subr.mxu0 0.0
    %638 = vmatpush1.msra.mxu0 0.0
    %639 = vmatprep.subr.mxu0 0.0
    %640 = vmatpush1.msra.mxu0 0.0
    %641 = vmatprep.subr.mxu0 0.0
    %642 = vmatpush1.msra.mxu0 0.0
    %643 = vmatprep.subr.mxu0 0.0
    %644 = vmatpush1.msra.mxu0 0.0
    %645 = vmatprep.subr.mxu0 0.0
    %646 = vmatpush1.msra.mxu0 0.0
    %647 = vmatprep.subr.mxu0 0.0
    %648 = vmatpush1.msra.mxu0 0.0
    %649 = vmatprep.subr.mxu0 0.0
    %650 = vmatpush1.msra.mxu0 0.0
    %651 = vmatprep.subr.mxu0 0.0
    %652 = vmatpush1.msra.mxu0 0.0
    %653 = vmatprep.subr.mxu0 0.0
    %654 = vmatpush1.msra.mxu0 0.0
    %655 = vmatprep.subr.mxu0 0.0
    %656 = vmatpush1.msra.mxu0 0.0
    %657 = vmatprep.subr.mxu0 0.0
    %658 = vmatpush1.msra.mxu0 0.0
    %659 = vmatprep.subr.mxu0 0.0
    %660 = vmatpush1.msra.mxu0 0.0
    %661 = vmatprep.subr.mxu0 0.0
    %662 = vmatpush1.msra.mxu0 0.0
    %663 = vmatprep.subr.mxu0 0.0
    %664 = vmatpush1.msra.mxu0 0.0
    %665 = vmatprep.subr.mxu0 0.0
    %666 = vmatpush1.msra.mxu0 0.0
    %667 = vmatprep.mubr.f32.mxu0 0.0
    %v668 = vand.u32 %v516, 4294901760
    %669 = vmatmul.mubr.f32.gmra.mrb[0].mxu0 %v668
    %v670 = vpop.f32.mrb[0].mxu0
    %v671 = vadd.f32 %v595, %v670
    %v672 = vpop.f32.mrb[0].mxu0
    %673 = vdwg.mxu0
    %674 = vmatprep.subr.mxu0 0.0
    %v675 = vand.u32 %v520, 4294901760
    %v676 = vsub.f32 %v520, %v675
    %677 = vmatpush1.msra.mxu0 %v676
    %678 = vmatprep.subr.mxu0 0.0
    %679 = vmatpush1.msra.mxu0 0.0
    %680 = vmatprep.subr.mxu0 0.0
    %681 = vmatpush1.msra.mxu0 0.0
    %682 = vmatprep.subr.mxu0 0.0
    %683 = vmatpush1.msra.mxu0 0.0
    %684 = vmatprep.subr.mxu0 0.0
    %685 = vmatpush1.msra.mxu0 0.0
    %686 = vmatprep.subr.mxu0 0.0
    %687 = vmatpush1.msra.mxu0 0.0
    %688 = vmatprep.subr.mxu0 0.0
    %689 = vmatpush1.msra.mxu0 0.0
    %690 = vmatprep.subr.mxu0 0.0
    %691 = vmatpush1.msra.mxu0 0.0
    %692 = vmatprep.subr.mxu0 0.0
    %693 = vmatpush1.msra.mxu0 0.0
    %694 = vmatprep.subr.mxu0 0.0
    %695 = vmatpush1.msra.mxu0 0.0
    %696 = vmatprep.subr.mxu0 0.0
    %697 = vmatpush1.msra.mxu0 0.0
    %698 = vmatprep.subr.mxu0 0.0
    %699 = vmatpush1.msra.mxu0 0.0
    %700 = vmatprep.subr.mxu0 0.0
    %701 = vmatpush1.msra.mxu0 0.0
    %702 = vmatprep.subr.mxu0 0.0
    %703 = vmatpush1.msra.mxu0 0.0
    %704 = vmatprep.subr.mxu0 0.0
    %705 = vmatpush1.msra.mxu0 0.0
    %706 = vmatprep.subr.mxu0 0.0
    %707 = vmatpush1.msra.mxu0 0.0
    %708 = vmatprep.subr.mxu0 0.0
    %709 = vmatpush1.msra.mxu0 0.0
    %710 = vmatprep.subr.mxu0 0.0
    %711 = vmatpush1.msra.mxu0 0.0
    %712 = vmatprep.subr.mxu0 0.0
    %713 = vmatpush1.msra.mxu0 0.0
    %714 = vmatprep.subr.mxu0 0.0
    %715 = vmatpush1.msra.mxu0 0.0
    %716 = vmatprep.subr.mxu0 0.0
    %717 = vmatpush1.msra.mxu0 0.0
    %718 = vmatprep.subr.mxu0 0.0
    %719 = vmatpush1.msra.mxu0 0.0
    %720 = vmatprep.subr.mxu0 0.0
    %721 = vmatpush1.msra.mxu0 0.0
    %722 = vmatprep.subr.mxu0 0.0
    %723 = vmatpush1.msra.mxu0 0.0
    %724 = vmatprep.subr.mxu0 0.0
    %725 = vmatpush1.msra.mxu0 0.0
    %726 = vmatprep.subr.mxu0 0.0
    %727 = vmatpush1.msra.mxu0 0.0
    %728 = vmatprep.subr.mxu0 0.0
    %729 = vmatpush1.msra.mxu0 0.0
    %730 = vmatprep.subr.mxu0 0.0
    %731 = vmatpush1.msra.mxu0 0.0
    %732 = vmatprep.subr.mxu0 0.0
    %733 = vmatpush1.msra.mxu0 0.0
    %734 = vmatprep.subr.mxu0 0.0
    %735 = vmatpush1.msra.mxu0 0.0
    %736 = vmatprep.subr.mxu0 0.0
    %737 = vmatpush1.msra.mxu0 0.0
    %738 = vmatprep.subr.mxu0 0.0
    %739 = vmatpush1.msra.mxu0 0.0
    %740 = vmatprep.mubr.f32.mxu0 0.0
    %v741 = vand.u32 %v516, 4294901760
    %v742 = vsub.f32 %v516, %v741
    %743 = vmatmul.mubr.f32.gmra.mrb[0].mxu0 %v742
    %v744 = vpop.f32.mrb[0].mxu0
    %v745 = vadd.f32 %v671, %v744
    %v746 = vpop.f32.mrb[0].mxu0
    %747 = vdwg.mxu0
    %748 = vmatprep.subr.mxu0 0.0
    %v749 = vand.u32 %v520, 4294901760
    %750 = vmatpush1.msra.mxu0 %v749
    %751 = vmatprep.subr.mxu0 0.0
    %752 = vmatpush1.msra.mxu0 0.0
    %753 = vmatprep.subr.mxu0 0.0
    %754 = vmatpush1.msra.mxu0 0.0
    %755 = vmatprep.subr.mxu0 0.0
    %756 = vmatpush1.msra.mxu0 0.0
    %757 = vmatprep.subr.mxu0 0.0
    %758 = vmatpush1.msra.mxu0 0.0
    %759 = vmatprep.subr.mxu0 0.0
    %760 = vmatpush1.msra.mxu0 0.0
    %761 = vmatprep.subr.mxu0 0.0
    %762 = vmatpush1.msra.mxu0 0.0
    %763 = vmatprep.subr.mxu0 0.0
    %764 = vmatpush1.msra.mxu0 0.0
    %765 = vmatprep.subr.mxu0 0.0
    %766 = vmatpush1.msra.mxu0 0.0
    %767 = vmatprep.subr.mxu0 0.0
    %768 = vmatpush1.msra.mxu0 0.0
    %769 = vmatprep.subr.mxu0 0.0
    %770 = vmatpush1.msra.mxu0 0.0
    %771 = vmatprep.subr.mxu0 0.0
    %772 = vmatpush1.msra.mxu0 0.0
    %773 = vmatprep.subr.mxu0 0.0
    %774 = vmatpush1.msra.mxu0 0.0
    %775 = vmatprep.subr.mxu0 0.0
    %776 = vmatpush1.msra.mxu0 0.0
    %777 = vmatprep.subr.mxu0 0.0
    %778 = vmatpush1.msra.mxu0 0.0
    %779 = vmatprep.subr.mxu0 0.0
    %780 = vmatpush1.msra.mxu0 0.0
    %781 = vmatprep.subr.mxu0 0.0
    %782 = vmatpush1.msra.mxu0 0.0
    %783 = vmatprep.subr.mxu0 0.0
    %784 = vmatpush1.msra.mxu0 0.0
    %785 = vmatprep.subr.mxu0 0.0
    %786 = vmatpush1.msra.mxu0 0.0
    %787 = vmatprep.subr.mxu0 0.0
    %788 = vmatpush1.msra.mxu0 0.0
    %789 = vmatprep.subr.mxu0 0.0
    %790 = vmatpush1.msra.mxu0 0.0
    %791 = vmatprep.subr.mxu0 0.0
    %792 = vmatpush1.msra.mxu0 0.0
    %793 = vmatprep.subr.mxu0 0.0
    %794 = vmatpush1.msra.mxu0 0.0
    %795 = vmatprep.subr.mxu0 0.0
    %796 = vmatpush1.msra.mxu0 0.0
    %797 = vmatprep.subr.mxu0 0.0
    %798 = vmatpush1.msra.mxu0 0.0
    %799 = vmatprep.subr.mxu0 0.0
    %800 = vmatpush1.msra.mxu0 0.0
    %801 = vmatprep.subr.mxu0 0.0
    %802 = vmatpush1.msra.mxu0 0.0
    %803 = vmatprep.subr.mxu0 0.0
    %804 = vmatpush1.msra.mxu0 0.0
    %805 = vmatprep.subr.mxu0 0.0
    %806 = vmatpush1.msra.mxu0 0.0
    %807 = vmatprep.subr.mxu0 0.0
    %808 = vmatpush1.msra.mxu0 0.0
    %809 = vmatprep.subr.mxu0 0.0
    %810 = vmatpush1.msra.mxu0 0.0
    %811 = vmatprep.subr.mxu0 0.0
    %812 = vmatpush1.msra.mxu0 0.0
    %813 = vmatprep.mubr.f32.mxu0 0.0
    %v814 = vand.u32 %v516, 4294901760
    %v815 = vsub.f32 %v516, %v814
    %v816 = vand.u32 %v815, 4294901760
    %817 = vmatmul.mubr.f32.gmra.mrb[0].mxu0 %v816
    %v818 = vpop.f32.mrb[0].mxu0
    %v819 = vadd.f32 %v745, %v818
    %v820 = vpop.f32.mrb[0].mxu0
    %821 = vdwg.mxu0
    %822 = vmatprep.subr.mxu0 0.0
    %v823 = vand.u32 %v520, 4294901760
    %v824 = vsub.f32 %v520, %v823
    %v825 = vand.u32 %v824, 4294901760
    %826 = vmatpush1.msra.mxu0 %v825
    %827 = vmatprep.subr.mxu0 0.0
    %828 = vmatpush1.msra.mxu0 0.0
    %829 = vmatprep.subr.mxu0 0.0
    %830 = vmatpush1.msra.mxu0 0.0
    %831 = vmatprep.subr.mxu0 0.0
    %832 = vmatpush1.msra.mxu0 0.0
    %833 = vmatprep.subr.mxu0 0.0
    %834 = vmatpush1.msra.mxu0 0.0
    %835 = vmatprep.subr.mxu0 0.0
    %836 = vmatpush1.msra.mxu0 0.0
    %837 = vmatprep.subr.mxu0 0.0
    %838 = vmatpush1.msra.mxu0 0.0
    %839 = vmatprep.subr.mxu0 0.0
    %840 = vmatpush1.msra.mxu0 0.0
    %841 = vmatprep.subr.mxu0 0.0
    %842 = vmatpush1.msra.mxu0 0.0
    %843 = vmatprep.subr.mxu0 0.0
    %844 = vmatpush1.msra.mxu0 0.0
    %845 = vmatprep.subr.mxu0 0.0
    %846 = vmatpush1.msra.mxu0 0.0
    %847 = vmatprep.subr.mxu0 0.0
    %848 = vmatpush1.msra.mxu0 0.0
    %849 = vmatprep.subr.mxu0 0.0
    %850 = vmatpush1.msra.mxu0 0.0
    %851 = vmatprep.subr.mxu0 0.0
    %852 = vmatpush1.msra.mxu0 0.0
    %853 = vmatprep.subr.mxu0 0.0
    %854 = vmatpush1.msra.mxu0 0.0
    %855 = vmatprep.subr.mxu0 0.0
    %856 = vmatpush1.msra.mxu0 0.0
    %857 = vmatprep.subr.mxu0 0.0
    %858 = vmatpush1.msra.mxu0 0.0
    %859 = vmatprep.subr.mxu0 0.0
    %860 = vmatpush1.msra.mxu0 0.0
    %861 = vmatprep.subr.mxu0 0.0
    %862 = vmatpush1.msra.mxu0 0.0
    %863 = vmatprep.subr.mxu0 0.0
    %864 = vmatpush1.msra.mxu0 0.0
    %865 = vmatprep.subr.mxu0 0.0
    %866 = vmatpush1.msra.mxu0 0.0
    %867 = vmatprep.subr.mxu0 0.0
    %868 = vmatpush1.msra.mxu0 0.0
    %869 = vmatprep.subr.mxu0 0.0
    %870 = vmatpush1.msra.mxu0 0.0
    %871 = vmatprep.subr.mxu0 0.0
    %872 = vmatpush1.msra.mxu0 0.0
    %873 = vmatprep.subr.mxu0 0.0
    %874 = vmatpush1.msra.mxu0 0.0
    %875 = vmatprep.subr.mxu0 0.0
    %876 = vmatpush1.msra.mxu0 0.0
    %877 = vmatprep.subr.mxu0 0.0
    %878 = vmatpush1.msra.mxu0 0.0
    %879 = vmatprep.subr.mxu0 0.0
    %880 = vmatpush1.msra.mxu0 0.0
    %881 = vmatprep.subr.mxu0 0.0
    %882 = vmatpush1.msra.mxu0 0.0
    %883 = vmatprep.subr.mxu0 0.0
    %884 = vmatpush1.msra.mxu0 0.0
    %885 = vmatprep.subr.mxu0 0.0
    %886 = vmatpush1.msra.mxu0 0.0
    %887 = vmatprep.subr.mxu0 0.0
    %888 = vmatpush1.msra.mxu0 0.0
    %889 = vmatprep.mubr.f32.mxu0 0.0
    %v890 = vand.u32 %v516, 4294901760
    %891 = vmatmul.mubr.f32.gmra.mrb[0].mxu0 %v890
    %v892 = vpop.f32.mrb[0].mxu0
    %v893 = vadd.f32 %v819, %v892
    %v894 = vpop.f32.mrb[0].mxu0
    %895 = vdwg.mxu0
    %896 = vmatprep.subr.mxu0 0.0
    %v897 = vand.u32 %v520, 4294901760
    %898 = vmatpush1.msra.mxu0 %v897
    %899 = vmatprep.subr.mxu0 0.0
    %900 = vmatpush1.msra.mxu0 0.0
    %901 = vmatprep.subr.mxu0 0.0
    %902 = vmatpush1.msra.mxu0 0.0
    %903 = vmatprep.subr.mxu0 0.0
    %904 = vmatpush1.msra.mxu0 0.0
    %905 = vmatprep.subr.mxu0 0.0
    %906 = vmatpush1.msra.mxu0 0.0
    %907 = vmatprep.subr.mxu0 0.0
    %908 = vmatpush1.msra.mxu0 0.0
    %909 = vmatprep.subr.mxu0 0.0
    %910 = vmatpush1.msra.mxu0 0.0
    %911 = vmatprep.subr.mxu0 0.0
    %912 = vmatpush1.msra.mxu0 0.0
    %913 = vmatprep.subr.mxu0 0.0
    %914 = vmatpush1.msra.mxu0 0.0
    %915 = vmatprep.subr.mxu0 0.0
    %916 = vmatpush1.msra.mxu0 0.0
    %917 = vmatprep.subr.mxu0 0.0
    %918 = vmatpush1.msra.mxu0 0.0
    %919 = vmatprep.subr.mxu0 0.0
    %920 = vmatpush1.msra.mxu0 0.0
    %921 = vmatprep.subr.mxu0 0.0
    %922 = vmatpush1.msra.mxu0 0.0
    %923 = vmatprep.subr.mxu0 0.0
    %924 = vmatpush1.msra.mxu0 0.0
    %925 = vmatprep.subr.mxu0 0.0
    %926 = vmatpush1.msra.mxu0 0.0
    %927 = vmatprep.subr.mxu0 0.0
    %928 = vmatpush1.msra.mxu0 0.0
    %929 = vmatprep.subr.mxu0 0.0
    %930 = vmatpush1.msra.mxu0 0.0
    %931 = vmatprep.subr.mxu0 0.0
    %932 = vmatpush1.msra.mxu0 0.0
    %933 = vmatprep.subr.mxu0 0.0
    %934 = vmatpush1.msra.mxu0 0.0
    %935 = vmatprep.subr.mxu0 0.0
    %936 = vmatpush1.msra.mxu0 0.0
    %937 = vmatprep.subr.mxu0 0.0
    %938 = vmatpush1.msra.mxu0 0.0
    %939 = vmatprep.subr.mxu0 0.0
    %940 = vmatpush1.msra.mxu0 0.0
    %941 = vmatprep.subr.mxu0 0.0
    %942 = vmatpush1.msra.mxu0 0.0
    %943 = vmatprep.subr.mxu0 0.0
    %944 = vmatpush1.msra.mxu0 0.0
    %945 = vmatprep.subr.mxu0 0.0
    %946 = vmatpush1.msra.mxu0 0.0
    %947 = vmatprep.subr.mxu0 0.0
    %948 = vmatpush1.msra.mxu0 0.0
    %949 = vmatprep.subr.mxu0 0.0
    %950 = vmatpush1.msra.mxu0 0.0
    %951 = vmatprep.subr.mxu0 0.0
    %952 = vmatpush1.msra.mxu0 0.0
    %953 = vmatprep.subr.mxu0 0.0
    %954 = vmatpush1.msra.mxu0 0.0
    %955 = vmatprep.subr.mxu0 0.0
    %956 = vmatpush1.msra.mxu0 0.0
    %957 = vmatprep.subr.mxu0 0.0
    %958 = vmatpush1.msra.mxu0 0.0
    %959 = vmatprep.subr.mxu0 0.0
    %960 = vmatpush1.msra.mxu0 0.0
    %961 = vmatprep.mubr.f32.mxu0 0.0
    %v962 = vand.u32 %v516, 4294901760
    %963 = vmatmul.mubr.f32.gmra.mrb[0].mxu0 %v962
    %v964 = vpop.f32.mrb[0].mxu0
    %v965 = vadd.f32 %v893, %v964
    %v966 = vpop.f32.mrb[0].mxu0
    %967 = vdwg.mxu0
    %vm968 = vcmask 25600
    %v969 = vsel %vm968, %v965, -inf
    %970 = vmax.xlane.f32.xlu0 %v969
    %v971 = vpop.xlane.xlu0 %970
    %v972 = vsub.f32 %v965, %v971
    %v973 = vmul.f32 %v972, 1.442695
    %v974 = vpow.pop %v973
    %v975 = vsel %vm968, %v974, 0.0
    %976 = vadd.xlane.f32.xlu0 %v975
    %v977 = vpop.xlane.xlu0 %976
    %v978 = vrcp.pop %v977
    %v979 = vmul.f32 %v974, %v978
    %980 = vst.msk [vmem:[#allocation2] sm:$0x3] %vm968, %v979
    %v981 = vld [vmem:[%s5] sm:$0xff]
    %v982 = vld [vmem:[%s5 + $0x8] sm:$0xff]
    %v983 = vld [vmem:[%s5 + $0x10] sm:$0x3]
    %v987 = vcombine.high %v981, %v981
    %v989 = vunpack.c.l.s4 1983009808
    %v990 = vunpack.c.0.s8 %v989
    %v991 = vlaneseq
    %v992 = vshrl.u32 %v991, 7
    %v993 = vsub.s32 %v990, %v992
    %v994 = vrot.slane %v981, %v993
    %v996 = vunpack.c.l.s4 1983009808
    %v997 = vunpack.c.0.s8 %v996
    %v998 = vlaneseq
    %v999 = vshrl.u32 %v998, 7
    %v1000 = vsub.s32 %v997, %v999
    %v1001 = vrot.slane %v987, %v1000
    %v1002 = vcombine.high %v994, %v994
    %v1003 = vcombine.high %v1001, %v1001
    %v1004 = vcombine.high %v982, %v982
    %v1006 = vunpack.c.l.s4 1983009808
    %v1007 = vunpack.c.0.s8 %v1006
    %v1008 = vlaneseq
    %v1009 = vshrl.u32 %v1008, 7
    %v1010 = vsub.s32 %v1007, %v1009
    %v1011 = vrot.slane %v982, %v1010
    %v1013 = vunpack.c.l.s4 1983009808
    %v1014 = vunpack.c.0.s8 %v1013
    %v1015 = vlaneseq
    %v1016 = vshrl.u32 %v1015, 7
    %v1017 = vsub.s32 %v1014, %v1016
    %v1018 = vrot.slane %v1004, %v1017
    %v1019 = vcombine.high %v1011, %v1011
    %v1020 = vcombine.high %v1018, %v1018
    %v1022 = vunpack.c.l.s4 1983009808
    %v1023 = vunpack.c.0.s8 %v1022
    %v1024 = vlaneseq
    %v1025 = vshrl.u32 %v1024, 7
    %v1026 = vsub.s32 %v1023, %v1025
    %v1027 = vrot.slane %v983, %v1026
    %v1029 = vsel %vm514, %v979, 0
    %vm1031 = vcmask 1041408
    %v1033 = vsel %vm1031, %v994, 0
    %v1036 = vsel %vm1031, %v1002, 0
    %v1039 = vsel %vm1031, %v1001, 0
    %v1042 = vsel %vm1031, %v1003, 0
    %v1045 = vsel %vm1031, %v1011, 0
    %v1048 = vsel %vm1031, %v1019, 0
    %v1051 = vsel %vm1031, %v1018, 0
    %v1054 = vsel %vm1031, %v1020, 0
    %v1057 = vsel %vm1031, %v1027, 0
    %1059 = vmatprep.subr.bf16.mxu0 %v1036
    %1060 = vmatpush1.bf16.msra.mxu0 %v1033
    %1061 = vmatprep.subr.bf16.mxu0 0
    %1062 = vmatpush1.bf16.msra.mxu0 0
    %1063 = vmatprep.subr.bf16.mxu0 0
    %1064 = vmatpush1.bf16.msra.mxu0 0
    %1065 = vmatprep.subr.bf16.mxu0 0
    %1066 = vmatpush1.bf16.msra.mxu0 0
    %1067 = vmatprep.subr.bf16.mxu0 0
    %1068 = vmatpush1.bf16.msra.mxu0 0
    %1069 = vmatprep.subr.bf16.mxu0 0
    %1070 = vmatpush1.bf16.msra.mxu0 0
    %1071 = vmatprep.subr.bf16.mxu0 0
    %1072 = vmatpush1.bf16.msra.mxu0 0
    %1073 = vmatprep.subr.bf16.mxu0 0
    %1074 = vmatpush1.bf16.msra.mxu0 0
    %1075 = vmatprep.subr.bf16.mxu0 0
    %1076 = vmatpush1.bf16.msra.mxu0 0
    %1077 = vmatprep.subr.bf16.mxu0 0
    %1078 = vmatpush1.bf16.msra.mxu0 0
    %1079 = vmatprep.subr.bf16.mxu0 0
    %1080 = vmatpush1.bf16.msra.mxu0 0
    %1081 = vmatprep.subr.bf16.mxu0 0
    %1082 = vmatpush1.bf16.msra.mxu0 0
    %1083 = vmatprep.subr.bf16.mxu0 0
    %1084 = vmatpush1.bf16.msra.mxu0 0
    %1085 = vmatprep.subr.bf16.mxu0 0
    %1086 = vmatpush1.bf16.msra.mxu0 0
    %1087 = vmatprep.subr.bf16.mxu0 0
    %1088 = vmatpush1.bf16.msra.mxu0 0
    %1089 = vmatprep.subr.bf16.mxu0 0
    %1090 = vmatpush1.bf16.msra.mxu0 0
    %1091 = vmatprep.mubr.f32.mxu0 0.0
    %1092 = vmatmul.mubr.f32.gmra.mrb[0].mxu0 %v1029
    %v1093 = vpop.f32.mrb[0].mxu0
    %v1094 = vadd.f32 0.0, %v1093
    %v1095 = vpop.f32.mrb[0].mxu0
    %v1096 = vadd.f32 0.0, %v1095
    %1097 = vdwg.mxu0
    %1098 = vmatprep.subr.bf16.mxu0 %v1042
    %1099 = vmatpush1.bf16.msra.mxu0 %v1039
    %1100 = vmatprep.subr.bf16.mxu0 0
    %1101 = vmatpush1.bf16.msra.mxu0 0
    %1102 = vmatprep.subr.bf16.mxu0 0
    %1103 = vmatpush1.bf16.msra.mxu0 0
    %1104 = vmatprep.subr.bf16.mxu0 0
    %1105 = vmatpush1.bf16.msra.mxu0 0
    %1106 = vmatprep.subr.bf16.mxu0 0
    %1107 = vmatpush1.bf16.msra.mxu0 0
    %1108 = vmatprep.subr.bf16.mxu0 0
    %1109 = vmatpush1.bf16.msra.mxu0 0
    %1110 = vmatprep.subr.bf16.mxu0 0
    %1111 = vmatpush1.bf16.msra.mxu0 0
    %1112 = vmatprep.subr.bf16.mxu0 0
    %1113 = vmatpush1.bf16.msra.mxu0 0
    %1114 = vmatprep.subr.bf16.mxu0 0
    %1115 = vmatpush1.bf16.msra.mxu0 0
    %1116 = vmatprep.subr.bf16.mxu0 0
    %1117 = vmatpush1.bf16.msra.mxu0 0
    %1118 = vmatprep.subr.bf16.mxu0 0
    %1119 = vmatpush1.bf16.msra.mxu0 0
    %1120 = vmatprep.subr.bf16.mxu0 0
    %1121 = vmatpush1.bf16.msra.mxu0 0
    %1122 = vmatprep.subr.bf16.mxu0 0
    %1123 = vmatpush1.bf16.msra.mxu0 0
    %1124 = vmatprep.subr.bf16.mxu0 0
    %1125 = vmatpush1.bf16.msra.mxu0 0
    %1126 = vmatprep.subr.bf16.mxu0 0
    %1127 = vmatpush1.bf16.msra.mxu0 0
    %1128 = vmatprep.subr.bf16.mxu0 0
    %1129 = vmatpush1.bf16.msra.mxu0 0
    %1130 = vmatprep.mubr.f32.mxu0 0.0
    %1131 = vmatmul.mubr.f32.gmra.mrb[0].mxu0 %v1029
    %v1132 = vpop.f32.mrb[0].mxu0
    %v1133 = vadd.f32 0.0, %v1132
    %v1134 = vpop.f32.mrb[0].mxu0
    %v1135 = vadd.f32 0.0, %v1134
    %1136 = vdwg.mxu0
    %1137 = vmatprep.subr.bf16.mxu0 %v1048
    %1138 = vmatpush1.bf16.msra.mxu0 %v1045
    %1139 = vmatprep.subr.bf16.mxu0 0
    %1140 = vmatpush1.bf16.msra.mxu0 0
    %1141 = vmatprep.subr.bf16.mxu0 0
    %1142 = vmatpush1.bf16.msra.mxu0 0
    %1143 = vmatprep.subr.bf16.mxu0 0
    %1144 = vmatpush1.bf16.msra.mxu0 0
    %1145 = vmatprep.subr.bf16.mxu0 0
    %1146 = vmatpush1.bf16.msra.mxu0 0
    %1147 = vmatprep.subr.bf16.mxu0 0
    %1148 = vmatpush1.bf16.msra.mxu0 0
    %1149 = vmatprep.subr.bf16.mxu0 0
    %1150 = vmatpush1.bf16.msra.mxu0 0
    %1151 = vmatprep.subr.bf16.mxu0 0
    %1152 = vmatpush1.bf16.msra.mxu0 0
    %1153 = vmatprep.subr.bf16.mxu0 0
    %1154 = vmatpush1.bf16.msra.mxu0 0
    %1155 = vmatprep.subr.bf16.mxu0 0
    %1156 = vmatpush1.bf16.msra.mxu0 0
    %1157 = vmatprep.subr.bf16.mxu0 0
    %1158 = vmatpush1.bf16.msra.mxu0 0
    %1159 = vmatprep.subr.bf16.mxu0 0
    %1160 = vmatpush1.bf16.msra.mxu0 0
    %1161 = vmatprep.subr.bf16.mxu0 0
    %1162 = vmatpush1.bf16.msra.mxu0 0
    %1163 = vmatprep.subr.bf16.mxu0 0
    %1164 = vmatpush1.bf16.msra.mxu0 0
    %1165 = vmatprep.subr.bf16.mxu0 0
    %1166 = vmatpush1.bf16.msra.mxu0 0
    %1167 = vmatprep.subr.bf16.mxu0 0
    %1168 = vmatpush1.bf16.msra.mxu0 0
    %1169 = vmatprep.mubr.f32.mxu0 0.0
    %1170 = vmatmul.mubr.f32.gmra.mrb[0].mxu0 %v1029
    %v1171 = vpop.f32.mrb[0].mxu0
    %v1172 = vadd.f32 0.0, %v1171
    %v1173 = vpop.f32.mrb[0].mxu0
    %v1174 = vadd.f32 0.0, %v1173
    %1175 = vdwg.mxu0
    %1176 = vmatprep.subr.bf16.mxu0 %v1054
    %1177 = vmatpush1.bf16.msra.mxu0 %v1051
    %1178 = vmatprep.subr.bf16.mxu0 0
    %1179 = vmatpush1.bf16.msra.mxu0 0
    %1180 = vmatprep.subr.bf16.mxu0 0
    %1181 = vmatpush1.bf16.msra.mxu0 0
    %1182 = vmatprep.subr.bf16.mxu0 0
    %1183 = vmatpush1.bf16.msra.mxu0 0
    %1184 = vmatprep.subr.bf16.mxu0 0
    %1185 = vmatpush1.bf16.msra.mxu0 0
    %1186 = vmatprep.subr.bf16.mxu0 0
    %1187 = vmatpush1.bf16.msra.mxu0 0
    %1188 = vmatprep.subr.bf16.mxu0 0
    %1189 = vmatpush1.bf16.msra.mxu0 0
    %1190 = vmatprep.subr.bf16.mxu0 0
    %1191 = vmatpush1.bf16.msra.mxu0 0
    %1192 = vmatprep.subr.bf16.mxu0 0
    %1193 = vmatpush1.bf16.msra.mxu0 0
    %1194 = vmatprep.subr.bf16.mxu0 0
    %1195 = vmatpush1.bf16.msra.mxu0 0
    %1196 = vmatprep.subr.bf16.mxu0 0
    %1197 = vmatpush1.bf16.msra.mxu0 0
    %1198 = vmatprep.subr.bf16.mxu0 0
    %1199 = vmatpush1.bf16.msra.mxu0 0
    %1200 = vmatprep.subr.bf16.mxu0 0
    %1201 = vmatpush1.bf16.msra.mxu0 0
    %1202 = vmatprep.subr.bf16.mxu0 0
    %1203 = vmatpush1.bf16.msra.mxu0 0
    %1204 = vmatprep.subr.bf16.mxu0 0
    %1205 = vmatpush1.bf16.msra.mxu0 0
    %1206 = vmatprep.subr.bf16.mxu0 0
    %1207 = vmatpush1.bf16.msra.mxu0 0
    %1208 = vmatprep.mubr.f32.mxu0 0.0
    %1209 = vmatmul.mubr.f32.gmra.mrb[0].mxu0 %v1029
    %v1210 = vpop.f32.mrb[0].mxu0
    %v1211 = vadd.f32 0.0, %v1210
    %v1212 = vpop.f32.mrb[0].mxu0
    %v1213 = vadd.f32 0.0, %v1212
    %1214 = vdwg.mxu0
    %1215 = vmatprep.subr.bf16.mxu0 0
    %1216 = vmatpush1.bf16.msra.mxu0 %v1057
    %1217 = vmatprep.subr.bf16.mxu0 0
    %1218 = vmatpush1.bf16.msra.mxu0 0
    %1219 = vmatprep.subr.bf16.mxu0 0
    %1220 = vmatpush1.bf16.msra.mxu0 0
    %1221 = vmatprep.subr.bf16.mxu0 0
    %1222 = vmatpush1.bf16.msra.mxu0 0
    %1223 = vmatprep.subr.bf16.mxu0 0
    %1224 = vmatpush1.bf16.msra.mxu0 0
    %1225 = vmatprep.subr.bf16.mxu0 0
    %1226 = vmatpush1.bf16.msra.mxu0 0
    %1227 = vmatprep.subr.bf16.mxu0 0
    %1228 = vmatpush1.bf16.msra.mxu0 0
    %1229 = vmatprep.subr.bf16.mxu0 0
    %1230 = vmatpush1.bf16.msra.mxu0 0
    %1231 = vmatprep.subr.bf16.mxu0 0
    %1232 = vmatpush1.bf16.msra.mxu0 0
    %1233 = vmatprep.subr.bf16.mxu0 0
    %1234 = vmatpush1.bf16.msra.mxu0 0
    %1235 = vmatprep.subr.bf16.mxu0 0
    %1236 = vmatpush1.bf16.msra.mxu0 0
    %1237 = vmatprep.subr.bf16.mxu0 0
    %1238 = vmatpush1.bf16.msra.mxu0 0
    %1239 = vmatprep.subr.bf16.mxu0 0
    %1240 = vmatpush1.bf16.msra.mxu0 0
    %1241 = vmatprep.subr.bf16.mxu0 0
    %1242 = vmatpush1.bf16.msra.mxu0 0
    %1243 = vmatprep.subr.bf16.mxu0 0
    %1244 = vmatpush1.bf16.msra.mxu0 0
    %1245 = vmatprep.subr.bf16.mxu0 0
    %1246 = vmatpush1.bf16.msra.mxu0 0
    %1247 = vmatprep.mubr.f32.mxu0 0.0
    %1248 = vmatmul.mubr.f32.gmra.mrb[0].mxu0 %v1029
    %v1249 = vpop.f32.mrb[0].mxu0
    %v1250 = vadd.f32 0.0, %v1249
    %v1251 = vpop.f32.mrb[0].mxu0
    %1252 = vdwg.mxu0
    %v1253 = vpack.c.bf16 %v1094, %v1094
    %v1254 = vpack.c.bf16 %v1096, %v1096
    %v1255 = vpack.c.bf16 %v1133, %v1133
    %v1256 = vpack.c.bf16 %v1135, %v1135
    %v1257 = vpack.c.bf16 %v1172, %v1172
    %v1258 = vpack.c.bf16 %v1174, %v1174
    %v1259 = vpack.c.bf16 %v1211, %v1211
    %v1260 = vpack.c.bf16 %v1213, %v1213
    %v1261 = vpack.c.bf16 %v1250, %v1250
    %v1271 = vcombine.low %v1253, %v1254
    %v1272 = vcombine.low %v1255, %v1256
    %v1273 = vcombine.low %v1257, %v1258
    %v1274 = vcombine.low %v1259, %v1260
    %v1276 = vunpack.c.l.s4 1966171168
    %v1277 = vunpack.c.0.s8 %v1276
    %v1278 = vlaneseq
    %v1279 = vshrl.u32 %v1278, 7
    %v1280 = vsub.s32 %v1277, %v1279
    %v1281 = vrot.slane %v1271, %v1280
    %v1283 = vunpack.c.l.s4 1966171168
    %v1284 = vunpack.c.0.s8 %v1283
    %v1285 = vlaneseq
    %v1286 = vshrl.u32 %v1285, 7
    %v1287 = vsub.s32 %v1284, %v1286
    %v1288 = vrot.slane %v1272, %v1287
    %v1290 = vunpack.c.l.s4 1966171168
    %v1291 = vunpack.c.0.s8 %v1290
    %v1292 = vlaneseq
    %v1293 = vshrl.u32 %v1292, 7
    %v1294 = vsub.s32 %v1291, %v1293
    %v1295 = vrot.slane %v1273, %v1294
    %v1297 = vunpack.c.l.s4 1966171168
    %v1298 = vunpack.c.0.s8 %v1297
    %v1299 = vlaneseq
    %v1300 = vshrl.u32 %v1299, 7
    %v1301 = vsub.s32 %v1298, %v1300
    %v1302 = vrot.slane %v1274, %v1301
    %v1303 = vcombine.low %v1281, %v1288
    %v1304 = vcombine.low %v1295, %v1302
    %v1306 = vunpack.c.l.s4 1966171168
    %v1307 = vunpack.c.0.s8 %v1306
    %v1308 = vlaneseq
    %v1309 = vshrl.u32 %v1308, 7
    %v1310 = vsub.s32 %v1307, %v1309
    %v1311 = vrot.slane %v1303, %v1310
    %v1313 = vunpack.c.l.s4 1966171168
    %v1314 = vunpack.c.0.s8 %v1313
    %v1315 = vlaneseq
    %v1316 = vshrl.u32 %v1315, 7
    %v1317 = vsub.s32 %v1314, %v1316
    %v1318 = vrot.slane %v1304, %v1317
    %v1319 = vcombine.low %v1311, %v1318
    %v1321 = vunpack.c.l.s4 1966171168
    %v1322 = vunpack.c.0.s8 %v1321
    %v1323 = vlaneseq
    %v1324 = vshrl.u32 %v1323, 7
    %v1325 = vsub.s32 %v1322, %v1324
    %v1326 = vrot.slane %v1261, %v1325
    %v1328 = vunpack.c.l.s4 1966171168
    %v1329 = vunpack.c.0.s8 %v1328
    %v1330 = vlaneseq
    %v1331 = vshrl.u32 %v1330, 7
    %v1332 = vsub.s32 %v1329, %v1331
    %v1333 = vrot.slane %v1326, %v1332
    %1336 = vst [vmem:[#allocation4] sm:$0xff] %v1319
    %1337 = vst [vmem:[#allocation4 + $0x8] sm:$0x1] %v1333
    %v1338 = vld [vmem:[%s6] sm:$0xf]
    %v1340 = vsel %vm518, %v1338, 0
    %1342 = vmatprep.subr.mxu0 0.0
    %1343 = vmatpush1.msra.mxu0 %v1340
    %1344 = vmatprep.subr.mxu0 0.0
    %1345 = vmatpush1.msra.mxu0 0.0
    %1346 = vmatprep.subr.mxu0 0.0
    %1347 = vmatpush1.msra.mxu0 0.0
    %1348 = vmatprep.subr.mxu0 0.0
    %1349 = vmatpush1.msra.mxu0 0.0
    %1350 = vmatprep.subr.mxu0 0.0
    %1351 = vmatpush1.msra.mxu0 0.0
    %1352 = vmatprep.subr.mxu0 0.0
    %1353 = vmatpush1.msra.mxu0 0.0
    %1354 = vmatprep.subr.mxu0 0.0
    %1355 = vmatpush1.msra.mxu0 0.0
    %1356 = vmatprep.subr.mxu0 0.0
    %1357 = vmatpush1.msra.mxu0 0.0
    %1358 = vmatprep.subr.mxu0 0.0
    %1359 = vmatpush1.msra.mxu0 0.0
    %1360 = vmatprep.subr.mxu0 0.0
    %1361 = vmatpush1.msra.mxu0 0.0
    %1362 = vmatprep.subr.mxu0 0.0
    %1363 = vmatpush1.msra.mxu0 0.0
    %1364 = vmatprep.subr.mxu0 0.0
    %1365 = vmatpush1.msra.mxu0 0.0
    %1366 = vmatprep.subr.mxu0 0.0
    %1367 = vmatpush1.msra.mxu0 0.0
    %1368 = vmatprep.subr.mxu0 0.0
    %1369 = vmatpush1.msra.mxu0 0.0
    %1370 = vmatprep.subr.mxu0 0.0
    %1371 = vmatpush1.msra.mxu0 0.0
    %1372 = vmatprep.subr.mxu0 0.0
    %1373 = vmatpush1.msra.mxu0 0.0
    %1374 = vmatprep.subr.mxu0 0.0
    %1375 = vmatpush1.msra.mxu0 0.0
    %1376 = vmatprep.subr.mxu0 0.0
    %1377 = vmatpush1.msra.mxu0 0.0
    %1378 = vmatprep.subr.mxu0 0.0
    %1379 = vmatpush1.msra.mxu0 0.0
    %1380 = vmatprep.subr.mxu0 0.0
    %1381 = vmatpush1.msra.mxu0 0.0
    %1382 = vmatprep.subr.mxu0 0.0
    %1383 = vmatpush1.msra.mxu0 0.0
    %1384 = vmatprep.subr.mxu0 0.0
    %1385 = vmatpush1.msra.mxu0 0.0
    %1386 = vmatprep.subr.mxu0 0.0
    %1387 = vmatpush1.msra.mxu0 0.0
    %1388 = vmatprep.subr.mxu0 0.0
    %1389 = vmatpush1.msra.mxu0 0.0
    %1390 = vmatprep.subr.mxu0 0.0
    %1391 = vmatpush1.msra.mxu0 0.0
    %1392 = vmatprep.subr.mxu0 0.0
    %1393 = vmatpush1.msra.mxu0 0.0
    %1394 = vmatprep.subr.mxu0 0.0
    %1395 = vmatpush1.msra.mxu0 0.0
    %1396 = vmatprep.subr.mxu0 0.0
    %1397 = vmatpush1.msra.mxu0 0.0
    %1398 = vmatprep.subr.mxu0 0.0
    %1399 = vmatpush1.msra.mxu0 0.0
    %1400 = vmatprep.subr.mxu0 0.0
    %1401 = vmatpush1.msra.mxu0 0.0
    %1402 = vmatprep.subr.mxu0 0.0
    %1403 = vmatpush1.msra.mxu0 0.0
    %1404 = vmatprep.subr.mxu0 0.0
    %1405 = vmatpush1.msra.mxu0 0.0
    %1406 = vmatprep.mubr.f32.mxu0 0.0
    %1407 = vmatmul.mubr.f32.gmra.mrb[0].mxu0 %v1029
    %v1408 = vpop.f32.mrb[0].mxu0
    %v1409 = vadd.f32 0.0, %v1408
    %v1410 = vpop.f32.mrb[0].mxu0
    %1411 = vdwg.mxu0
    %vm1412 = vcmask 58368
    %1413 = vst.msk [vmem:[#allocation6] sm:$0x3] %vm1412, %v1409
    // Predicated region
    $region30: #{tpu_custom_call.1} parent=1 // pred_check
      _
    $region31: #{tpu_custom_call.1} parent=1 // pred_check_branch
      %1415 = sbr.rel (0) target = $region33
    $region32: #{tpu_custom_call.1} parent=1 // pred_region
      %s1417 = ssub.s32 32, 32
      %1418 = vsyncadd [#allocation3], %s1417
      %s1420 = sshll.u32 [#allocation2], 4
      %s1421 = int_to_ptr.vmem [resolvable:$true] %s1420
      %1423 = dma.vmem_to_hbm [thread:$0]  %s1421, 32, %s7, [#allocation3]
    $region33: #{tpu_custom_call.1} parent=1 // pred_fallthru
      _
    // Predicated region
    $region34: #{tpu_custom_call.1} parent=1 // pred_check
      _
    $region35: #{tpu_custom_call.1} parent=1 // pred_check_branch
      %1425 = sbr.rel (0) target = $region37
    $region36: #{tpu_custom_call.1} parent=1 // pred_region
      %s1427 = ssub.s32 144, 144
      %1428 = vsyncadd [#allocation5], %s1427
      %s1430 = sshll.u32 [#allocation4], 4
      %s1431 = int_to_ptr.vmem [resolvable:$true] %s1430
      %1433 = dma.vmem_to_hbm [thread:$0]  %s1431, 144, %s8, [#allocation5]
    $region37: #{tpu_custom_call.1} parent=1 // pred_fallthru
      _
    // Predicated region
    $region38: #{tpu_custom_call.1} parent=1 // pred_check
      _
    $region39: #{tpu_custom_call.1} parent=1 // pred_check_branch
      %1435 = sbr.rel (0) target = $region41
    $region40: #{tpu_custom_call.1} parent=1 // pred_region
      %s1437 = ssub.s32 32, 32
      %1438 = vsyncadd [#allocation5], %s1437
      %s1440 = sshll.u32 [#allocation6], 4
      %s1441 = int_to_ptr.vmem [resolvable:$true] %s1440
      %1443 = dma.vmem_to_hbm [thread:$0]  %s1441, 32, %s9, [#allocation5]
    $region41: #{tpu_custom_call.1} parent=1 // pred_fallthru
      _
    // Predicated region
    $region42: #{tpu_custom_call.1} parent=1 // pred_check
      _
    $region43: #{tpu_custom_call.1} parent=1 // pred_check_branch
      %1445 = sbr.rel (0) target = $region45
    $region44: #{tpu_custom_call.1} parent=1 // pred_region
      %1446 = dma.done [#allocation3], 32
    $region45: #{tpu_custom_call.1} parent=1 // pred_fallthru
      _
    // Predicated region
    $region46: #{tpu_custom_call.1} parent=1 // pred_check
      _
    $region47: #{tpu_custom_call.1} parent=1 // pred_check_branch
      %1448 = sbr.rel (0) target = $region49
    $region48: #{tpu_custom_call.1} parent=1 // pred_region
      %1449 = dma.done [#allocation5], 144
    $region49: #{tpu_custom_call.1} parent=1 // pred_fallthru
      _
    // Predicated region
    $region50: #{tpu_custom_call.1} parent=1 // pred_check
      _
    $region51: #{tpu_custom_call.1} parent=1 // pred_check_branch
      %1451 = sbr.rel (0) target = $region53
    $region52: #{tpu_custom_call.1} parent=1 // pred_region
      %1452 = dma.done [#allocation5], 32
    $region53: #{tpu_custom_call.1} parent=1 // pred_fallthru
      _
    %1453 = vsyncpa [#allocation3], 1
    %1454 = vsyncpa [#allocation5], 1

</llo_original>
